<compile_context>
chip_gen: v7x
topology: tpu7x:2x2x1
jax: 0.10.0
libtpu: 0.0.40
codegen_flags: <defaults>
</compile_context>

<pallas_src>
import jax
import jax.numpy as jnp
from jax.experimental import pallas as pl
from jax.experimental.pallas import tpu as pltpu

LANES = 128              # vreg lane width — last dim stays lane-dense.
SUBLANE_MULT = 32        # round tiles to 32 sublanes (legal for f32/bf16/int8).
MIN_TILE_ROWS = 256      # keep per-step DMA large enough to amortize overhead.
MAX_TILE_ROWS = 8192     # 8192 x 128 x 4 B = 4 MiB per f32 buffer.
TARGET_STEPS = 4         # >= 2 * num TensorCores (v7x has 2 TCs).
FAST_PATH_ELEMS = 1 << 15  # below this, fused XLA elementwise is strictly faster.


def _round_up(x, m):
    return ((x + m - 1) // m) * m


def _gol_kernel(nbr_ref, cur_ref, out_ref):
    nbr = nbr_ref[...]
    cur = cur_ref[...]
    # Exactly equivalent to the nested torch.where in the reference: the inner
    # condition (cur==0)&(nbr==3) is a strict subset of the outer one, so a
    # single select reproduces the same output.
    born = (cur == 0) & ((nbr == 2) | (nbr == 3))
    out_ref[...] = born.astype(out_ref.dtype)


def game_of_life_2layer(neighbors, current_state, *, force_pallas=False):
    """Pallas implementation of GameOfLife2Layer.forward.

    neighbors, current_state: (B, H, W) arrays (float grids of small ints)
    returns: (B, 1, H, W) float32
    """
    assert neighbors.shape == current_state.shape
    B, H, W = neighbors.shape
    n = B * H * W

    # ---- tiny-input fast path: dispatch overhead dominates below ~32K elems.
    if n < FAST_PATH_ELEMS and not force_pallas:
        born = (current_state == 0) & ((neighbors == 2) | (neighbors == 3))
        return born.astype(jnp.float32)[:, None, :, :]

    # ---- lane-dense 2D layout: (rows, 128); pad only to a 128-lane multiple.
    rows = pl.cdiv(n, LANES)
    n_pad = rows * LANES

    def to_lane_dense(x):
        flat = x.reshape(-1)                    # metadata-only (contiguous)
        if n_pad != n:                          # tiny pad only when n % 128 != 0
            flat = jnp.pad(flat, (0, n_pad - n))
        return flat.reshape(rows, LANES)

    nbr2d = to_lane_dense(neighbors)            # native dtype, no wrapper cast
    cur2d = to_lane_dense(current_state)

    # ---- tiling policy: ~TARGET_STEPS grid steps, 32-sublane aligned,
    #      bounded so pipelined buffers stay small on every TPU generation.
    tile_rows = _round_up(pl.cdiv(rows, TARGET_STEPS), SUBLANE_MULT)
    tile_rows = max(MIN_TILE_ROWS, min(MAX_TILE_ROWS, tile_rows))
    tile_rows = min(tile_rows, _round_up(rows, SUBLANE_MULT))

    grid = (pl.cdiv(rows, tile_rows),)          # ragged last block is fine
    blk = pl.BlockSpec((tile_rows, LANES), lambda i: (i, 0))

    in_itemsize = jnp.dtype(neighbors.dtype).itemsize
    in_tile_bytes = tile_rows * LANES * in_itemsize
    out_tile_bytes = tile_rows * LANES * 4
    # 2 inputs + 1 output, default Buffered(2) each, plus ~2 MiB headroom.
    vmem_bytes = 2 * (2 * in_tile_bytes) + 2 * out_tile_bytes + (2 << 20)

    out2d = pl.pallas_call(
        _gol_kernel,
        out_shape=jax.ShapeDtypeStruct((rows, LANES), jnp.float32),
        grid=grid,
        in_specs=[blk, blk],
        out_specs=blk,
        compiler_params=pltpu.CompilerParams(
            # Megacore sharding on v7x (2 TCs); harmless on v5e/v6e.
            dimension_semantics=("parallel",),
            vmem_limit_bytes=vmem_bytes,
        ),
        cost_estimate=pl.CostEstimate(
            flops=3 * n,
            transcendentals=0,
            bytes_accessed=2 * n * in_itemsize + n * 4,
        ),
    )(nbr2d, cur2d)

    # torch's .unsqueeze(1): metadata-only reshape when n is a 128 multiple.
    if n_pad == n:
        return out2d.reshape(B, 1, H, W)
    return out2d.reshape(-1)[:n].reshape(B, 1, H, W)


def _reference(neighbors, current_state):
    cond1 = (current_state == 0) & ((neighbors == 2) | (neighbors == 3))
    cond2 = (current_state == 0) & (neighbors == 3)
    new_state = jnp.where(cond1, 1.0, jnp.where(cond2, 1.0, 0.0))
    return new_state[:, None, :, :].astype(jnp.float32)


if __name__ == "__main__":
    key = jax.random.PRNGKey(0)

    def make_inputs(k, shape):
        k1, k2 = jax.random.split(k)
        # Integer-valued float grids: neighbor counts in [0, 8], states {0, 1}.
        nbr = jax.random.randint(k1, shape, 0, 9).astype(jnp.float32)
        cur = jax.random.randint(k2, shape, 0, 2).astype(jnp.float32)
        return nbr, cur

    k_small, k_big, k_ragged = jax.random.split(key, 3)
    cases = [
        ((2, 16, 16), k_small, False),    # module-sized input (fast path)
        ((2, 512, 512), k_big, False),    # pipelined Pallas path (4 grid steps)
        ((3, 37, 29), k_ragged, True),    # ragged / non-128-multiple via Pallas
    ]
    for shape, k, force in cases:
        nbr, cur = make_inputs(k, shape)
        out = jax.block_until_ready(
            game_of_life_2layer(nbr, cur, force_pallas=force))
        ref = _reference(nbr, cur)
        B, H, W = shape
        assert out.shape == (B, 1, H, W), (shape, out.shape)
        assert out.dtype == jnp.float32, out.dtype
        assert jnp.array_equal(out, ref), f"mismatch vs reference for {shape}"

    print("KERNEL_OK")
</pallas_src>

<mosaic_0001>
module attributes {stable_mosaic.version = 11 : i64} {
  func.func @_gol_kernel(%arg0: i32, %arg1: memref<1024x128xf32, #tpu.memory_space<vmem>>, %arg2: memref<1024x128xf32, #tpu.memory_space<vmem>>, %arg3: memref<1024x128xf32, #tpu.memory_space<vmem>>) attributes {dimension_semantics = [#tpu.dimension_semantics<parallel>], iteration_bounds = array<i64: 4>, scalar_prefetch = 0 : i64, scratch_operands = 0 : i64, tpu.core_type = #tpu.core_type<tc>, window_params = [{transform_indices = @transform_0, window_bounds = array<i64: 1024, 128>}, {transform_indices = @transform_1, window_bounds = array<i64: 1024, 128>}, {transform_indices = @transform_2, window_bounds = array<i64: 1024, 128>}]} {
    %c0 = arith.constant 0 : index
    %c0_0 = arith.constant 0 : index
    %0 = vector.load %arg1[%c0, %c0_0] : memref<1024x128xf32, #tpu.memory_space<vmem>>, vector<1024x128xf32>
    %c0_1 = arith.constant 0 : index
    %c0_2 = arith.constant 0 : index
    %1 = vector.load %arg2[%c0_1, %c0_2] : memref<1024x128xf32, #tpu.memory_space<vmem>>, vector<1024x128xf32>
    %cst = arith.constant 0.000000e+00 : f32
    %2 = vector.broadcast %cst : f32 to vector<1024x128xf32>
    %3 = arith.cmpf oeq, %1, %2 : vector<1024x128xf32>
    %cst_3 = arith.constant 2.000000e+00 : f32
    %4 = vector.broadcast %cst_3 : f32 to vector<1024x128xf32>
    %5 = arith.cmpf oeq, %0, %4 : vector<1024x128xf32>
    %cst_4 = arith.constant 3.000000e+00 : f32
    %6 = vector.broadcast %cst_4 : f32 to vector<1024x128xf32>
    %7 = arith.cmpf oeq, %0, %6 : vector<1024x128xf32>
    %8 = arith.ori %5, %7 : vector<1024x128xi1>
    %9 = arith.andi %3, %8 : vector<1024x128xi1>
    %10 = arith.extui %9 : vector<1024x128xi1> to vector<1024x128xi32>
    %11 = arith.sitofp %10 : vector<1024x128xi32> to vector<1024x128xf32>
    %c0_5 = arith.constant 0 : index
    %c0_6 = arith.constant 0 : index
    %12 = vector.load %arg3[%c0_5, %c0_6] : memref<1024x128xf32, #tpu.memory_space<vmem>>, vector<1024x128xf32>
    tpu.vector_store %arg3[%c0_5, %c0_6], %11 {strides = array<i32>} : memref<1024x128xf32, #tpu.memory_space<vmem>>, vector<1024x128xf32>,
    return
  }
  func.func @transform_0(%arg0: i32) -> (i32, i32) {
    %c0_i32 = arith.constant 0 : i32
    %c0_i32_0 = arith.constant 0 : i32
    return %arg0, %c0_i32 : i32, i32
  }
  func.func @transform_1(%arg0: i32) -> (i32, i32) {
    %c0_i32 = arith.constant 0 : i32
    %c0_i32_0 = arith.constant 0 : i32
    return %arg0, %c0_i32 : i32, i32
  }
  func.func @transform_2(%arg0: i32) -> (i32, i32) {
    %c0_i32 = arith.constant 0 : i32
    %c0_i32_0 = arith.constant 0 : i32
    return %arg0, %c0_i32 : i32, i32
  }
}

</mosaic_0001>

<llo_original>
// kernel: tpu_custom_call.1
$region0: #{tpu_custom_call.1}
  #allocation0 [shape = 'u32[]', space=smem, size = 0x4, offset = 0x4, fixed_abs, tag = 'smem constant byte address 0x4 - core index']
  #allocation1 [shape = 'u32[144,128]{1,0:T(1,128)}', space=vmem, size = 0x12000, scoped, tag = 'internal scratch']
  %s0 = inlined_call_operand.hbm [shape: f32[4096,128], index: 0, kind: input, shape index: {}]
  %s1 = inlined_call_operand.hbm [shape: f32[4096,128], index: 1, kind: input, shape index: {}]
  %s2 = inlined_call_operand.hbm [shape: f32[4096,128], index: 2, kind: output, shape index: {}]
  %s3 = sld [smem:[#allocation0]]
  $region49: #{tpu_custom_call.1} parent=0
    _
  %s5 = ssub.s32 1, %s3
  %s6 = scalar_select 0, %s5, %s3
  $region1: #{tpu_custom_call.1} parent=0
    #allocation2 [shape = 'u8[1048576]{0}', space=vmem, size = 0x100000, scoped, tag = 'input window, operand 0']
    #allocation3 [shape = 's32[2]{0}', space=sflag, size = 0x8, scoped, tag = 'scoped memory for tpu_custom_call.1']
    #allocation4 [shape = 's32[2]{0}', space=sflag, size = 0x8, scoped, tag = 'scoped memory for tpu_custom_call.1']
    #allocation5 [shape = 'u8[1048576]{0}', space=vmem, size = 0x100000, scoped, tag = 'input window, operand 1']
    #allocation6 [shape = 's32[2]{0}', space=sflag, size = 0x8, scoped, tag = 'scoped memory for tpu_custom_call.1']
    #allocation7 [shape = 'u8[1048576]{0}', space=vmem, size = 0x100000, scoped, tag = 'output window, operand 0']
    %7 = vsyncpa [#allocation3], 0
    %s8 = scalar_lea.sflag [#allocation3], 1
    %9 = vsyncpa %s8, 0
    %10 = vsyncpa [#allocation6], 0
    %s11 = scalar_lea.sflag [#allocation6], 1
    %12 = vsyncpa %s11, 0
    %13 = vsyncpa [#allocation4], 0
    %s14 = scalar_lea.sflag [#allocation4], 1
    %15 = vsyncpa %s14, 0
    loop: start=0, step=1, limit=6
    $region2: #{tpu_custom_call.1} parent=1 // loop_pre_header
      _
    $region3: #{tpu_custom_call.1} parent=1 // loop_header
      %s17 = sphi 0, %s21
      %p18 = scmp.ge.s32.totalorder %s17, 6
      %s27 = sphi 0, %s29
      %s30 = sphi 0, %s27
      %s31 = sphi 0, %s30
      %s47 = sphi 0, %s31
      %s53 = sphi 0, %s55
      %s56 = sphi 0, %s53
      %s57 = sphi 0, %s56
      %s73 = sphi 0, %s57
      %s79 = sphi 0, %s81
      %s82 = sphi 0, %s79
      %s83 = sphi 0, %s82
      %s99 = sphi 0, %s83
    $region4: #{tpu_custom_call.1} parent=1 // loop_header_branch
      %20 = sbr.rel (%p18) target = $region8
    $region5: #{tpu_custom_call.1} parent=1 // loop_body
      %s22 = ssub.s32 %s17, 1
      %s23 = ssub.s32 %s17, 2
      %s24 = sadd.s32 %s17, 1
      %s25 = ssub.s32 %s17, %s24
      %p26 = scmp.eq.s32.totalorder %s25, 0
      %s28 = sadd.s32 %s27, 1
      %s29 = scalar_select %p26, %s27, %s28
      %p32 = pneg %p26
      %p33 = scmp.eq.s32.totalorder %s17, 3
      %p34 = por %p32, %p33
      %p35 = scmp.ne.s32.totalorder %s27, %s30
      %p36 = scmp.eq.s32.totalorder %s17, 0
      %p37 = por %p35, %p36
      %p38 = scmp.ne.s32.totalorder %s27, %s30
      %p39 = scmp.eq.s32.totalorder %s22, 3
      %p40 = por %p38, %p39
      %p41 = scmp.ne.s32.totalorder %s30, %s31
      %p42 = scmp.eq.s32.totalorder %s22, 0
      %p43 = por %p41, %p42
      %p44 = scmp.ne.s32.totalorder %s30, %s31
      %p45 = scmp.eq.s32.totalorder %s23, 3
      %p46 = por %p44, %p45
      %p48 = scmp.ne.s32.totalorder %s31, %s47
      %p49 = scmp.eq.s32.totalorder %s23, 0
      %p50 = por %p48, %p49
      %s51 = ssub.s32 %s17, %s24
      %p52 = scmp.eq.s32.totalorder %s51, 0
      %s54 = sadd.s32 %s53, 1
      %s55 = scalar_select %p52, %s53, %s54
      %p58 = pneg %p52
      %p59 = scmp.eq.s32.totalorder %s17, 3
      %p60 = por %p58, %p59
      %p61 = scmp.ne.s32.totalorder %s53, %s56
      %p62 = scmp.eq.s32.totalorder %s17, 0
      %p63 = por %p61, %p62
      %p64 = scmp.ne.s32.totalorder %s53, %s56
      %p65 = scmp.eq.s32.totalorder %s22, 3
      %p66 = por %p64, %p65
      %p67 = scmp.ne.s32.totalorder %s56, %s57
      %p68 = scmp.eq.s32.totalorder %s22, 0
      %p69 = por %p67, %p68
      %p70 = scmp.ne.s32.totalorder %s56, %s57
      %p71 = scmp.eq.s32.totalorder %s23, 3
      %p72 = por %p70, %p71
      %p74 = scmp.ne.s32.totalorder %s57, %s73
      %p75 = scmp.eq.s32.totalorder %s23, 0
      %p76 = por %p74, %p75
      %s77 = ssub.s32 %s17, %s24
      %p78 = scmp.eq.s32.totalorder %s77, 0
      %s80 = sadd.s32 %s79, 1
      %s81 = scalar_select %p78, %s79, %s80
      %p84 = pneg %p78
      %p85 = scmp.eq.s32.totalorder %s17, 3
      %p86 = por %p84, %p85
      %p87 = scmp.ne.s32.totalorder %s79, %s82
      %p88 = scmp.eq.s32.totalorder %s17, 0
      %p89 = por %p87, %p88
      %p90 = scmp.ne.s32.totalorder %s79, %s82
      %p91 = scmp.eq.s32.totalorder %s22, 3
      %p92 = por %p90, %p91
      %p93 = scmp.ne.s32.totalorder %s82, %s83
      %p94 = scmp.eq.s32.totalorder %s22, 0
      %p95 = por %p93, %p94
      %p96 = scmp.ne.s32.totalorder %s82, %s83
      %p97 = scmp.eq.s32.totalorder %s23, 3
      %p98 = por %p96, %p97
      %p100 = scmp.ne.s32.totalorder %s83, %s99
      %p101 = scmp.eq.s32.totalorder %s23, 0
      %p102 = por %p100, %p101
      %p103 = scmp.le.s32.totalorder 1, %s17
      %p104 = scmp.lt.s32.totalorder %s17, 5
      %p105 = pnand %p103, %p104
      %p106 = pneg %p105
      // Predicated region
      $region9: #{tpu_custom_call.1} parent=5 // pred_check
        _
      $region10: #{tpu_custom_call.1} parent=5 // pred_check_branch
        %108 = sbr.rel (%p105) target = $region12
      $region11: #{tpu_custom_call.1} parent=5 // pred_region
        %s109 = ssub.s32 %s17, 1
      $region12: #{tpu_custom_call.1} parent=5 // pred_fallthru
        _
      %p110 = scmp.lt.s32.totalorder %s17, 4
      // Predicated region
      $region13: #{tpu_custom_call.1} parent=5 // pred_check
        %p111 = pneg %p110
      $region14: #{tpu_custom_call.1} parent=5 // pred_check_branch
        %113 = sbr.rel (%p111) target = $region16
      $region15: #{tpu_custom_call.1} parent=5 // pred_region
        // Predicated region
        $region17: #{tpu_custom_call.1} parent=15 // pred_check
          %p114 = pneg %p37
        $region18: #{tpu_custom_call.1} parent=15 // pred_check_branch
          %116 = sbr.rel (%p114) target = $region20
        $region19: #{tpu_custom_call.1} parent=15 // pred_region
          %s117 = sand.u32 %s27, 1
          %s118 = scalar_lea.sflag [#allocation3], %s117
          %s119 = sand.u32 %s27, 1
          %s120 = smul.addr %s119, 1024
          %s121 = scalar_lea.vmem [#allocation2], %s120
          %s122 = smul.u32 128, %s17
          %s124 = ssub.s32 16384, 16384
          %125 = vsyncadd %s118, %s124
          %s126 = smul.addr %s122, 128
          %s127 = scalar_lea.hbm %s0, %s126
          %s128 = sshll.u32 %s121, 4
          %s129 = int_to_ptr.vmem [resolvable:$true] %s128
          %134 = dma.hbm_to_vmem [thread:$0]  %s127, 16384, %s129, %s118, 128, 128, 8
        $region20: #{tpu_custom_call.1} parent=15 // pred_fallthru
          _
        // Predicated region
        $region21: #{tpu_custom_call.1} parent=15 // pred_check
          %p135 = pneg %p63
        $region22: #{tpu_custom_call.1} parent=15 // pred_check_branch
          %137 = sbr.rel (%p135) target = $region24
        $region23: #{tpu_custom_call.1} parent=15 // pred_region
          %s138 = sand.u32 %s53, 1
          %s139 = scalar_lea.sflag [#allocation6], %s138
          %s140 = sand.u32 %s53, 1
          %s141 = smul.addr %s140, 1024
          %s142 = scalar_lea.vmem [#allocation5], %s141
          %s143 = smul.u32 128, %s17
          %s145 = ssub.s32 16384, 16384
          %146 = vsyncadd %s139, %s145
          %s147 = smul.addr %s143, 128
          %s148 = scalar_lea.hbm %s1, %s147
          %s149 = sshll.u32 %s142, 4
          %s150 = int_to_ptr.vmem [resolvable:$true] %s149
          %155 = dma.hbm_to_vmem [thread:$0]  %s148, 16384, %s150, %s139, 128, 128, 8
        $region24: #{tpu_custom_call.1} parent=15 // pred_fallthru
          _
      $region16: #{tpu_custom_call.1} parent=5 // pred_fallthru
        _
      %p156 = scmp.le.s32.totalorder 1, %s17
      %p157 = scmp.lt.s32.totalorder %s17, 5
      %p158 = pnand %p156, %p157
      %p159 = pneg %p158
      // Predicated region
      $region25: #{tpu_custom_call.1} parent=5 // pred_check
        _
      $region26: #{tpu_custom_call.1} parent=5 // pred_check_branch
        %161 = sbr.rel (%p158) target = $region28
      $region27: #{tpu_custom_call.1} parent=5 // pred_region
        %s162 = ssub.s32 %s17, 1
        %s163 = sand.u32 %s30, 1
        %s164 = scalar_lea.sflag [#allocation3], %s163
        %s165 = sand.u32 %s30, 1
        %s166 = smul.addr %s165, 1024
        %s167 = scalar_lea.vmem [#allocation2], %s166
        // Predicated region
        $region29: #{tpu_custom_call.1} parent=27 // pred_check
          %p168 = pneg %p43
        $region30: #{tpu_custom_call.1} parent=27 // pred_check_branch
          %170 = sbr.rel (%p168) target = $region32
        $region31: #{tpu_custom_call.1} parent=27 // pred_region
          %171 = dma.done %s164, 16384
        $region32: #{tpu_custom_call.1} parent=27 // pred_fallthru
          _
        %s172 = sand.u32 %s56, 1
        %s173 = scalar_lea.sflag [#allocation6], %s172
        %s174 = sand.u32 %s56, 1
        %s175 = smul.addr %s174, 1024
        %s176 = scalar_lea.vmem [#allocation5], %s175
        // Predicated region
        $region33: #{tpu_custom_call.1} parent=27 // pred_check
          %p177 = pneg %p69
        $region34: #{tpu_custom_call.1} parent=27 // pred_check_branch
          %179 = sbr.rel (%p177) target = $region36
        $region35: #{tpu_custom_call.1} parent=27 // pred_region
          %180 = dma.done %s173, 16384
        $region36: #{tpu_custom_call.1} parent=27 // pred_fallthru
          _
        %s181 = sand.u32 %s30, 1
        %s182 = scalar_lea.sflag [#allocation3], %s181
        %s183 = sand.u32 %s30, 1
        %s184 = smul.addr %s183, 1024
        %s185 = scalar_lea.vmem [#allocation2], %s184
        %p186 = pneg %p43
        %p187 = pneg %p40
        %s188 = sand.u32 %s56, 1
        %s189 = scalar_lea.sflag [#allocation6], %s188
        %s190 = sand.u32 %s56, 1
        %s191 = smul.addr %s190, 1024
        %s192 = scalar_lea.vmem [#allocation5], %s191
        %p193 = pneg %p69
        %p194 = pneg %p66
        %p195 = pneg %p95
        %p196 = pneg %p92
        %s197 = sand.u32 %s82, 1
        %s198 = scalar_lea.sflag [#allocation4], %s197
        %s199 = sand.u32 %s82, 1
        %s200 = smul.addr %s199, 1024
        %s201 = scalar_lea.vmem [#allocation7], %s200
        %s202 = smul.u32 128, %s22
        %s203 = smul.u32 128, %s22
        %s204 = smul.u32 128, %s22
        %v205 = vld [vmem:[%s167] sm:$0xff]
        %v206 = vld [vmem:[%s167 + $0x8] sm:$0xff]
        %v207 = vld [vmem:[%s167 + $0x10] sm:$0xff]
        %v208 = vld [vmem:[%s167 + $0x18] sm:$0xff]
        %v209 = vld [vmem:[%s167 + $0x20] sm:$0xff]
        %v210 = vld [vmem:[%s167 + $0x28] sm:$0xff]
        %v211 = vld [vmem:[%s167 + $0x30] sm:$0xff]
        %v212 = vld [vmem:[%s167 + $0x38] sm:$0xff]
        %v213 = vld [vmem:[%s167 + $0x40] sm:$0xff]
        %v214 = vld [vmem:[%s167 + $0x48] sm:$0xff]
        %v215 = vld [vmem:[%s167 + $0x50] sm:$0xff]
        %v216 = vld [vmem:[%s167 + $0x58] sm:$0xff]
        %v217 = vld [vmem:[%s167 + $0x60] sm:$0xff]
        %v218 = vld [vmem:[%s167 + $0x68] sm:$0xff]
        %v219 = vld [vmem:[%s167 + $0x70] sm:$0xff]
        %v220 = vld [vmem:[%s167 + $0x78] sm:$0xff]
        %v221 = vld [vmem:[%s167 + $0x80] sm:$0xff]
        %v222 = vld [vmem:[%s167 + $0x88] sm:$0xff]
        %v223 = vld [vmem:[%s167 + $0x90] sm:$0xff]
        %v224 = vld [vmem:[%s167 + $0x98] sm:$0xff]
        %v225 = vld [vmem:[%s167 + $0xa0] sm:$0xff]
        %v226 = vld [vmem:[%s167 + $0xa8] sm:$0xff]
        %v227 = vld [vmem:[%s167 + $0xb0] sm:$0xff]
        %v228 = vld [vmem:[%s167 + $0xb8] sm:$0xff]
        %v229 = vld [vmem:[%s167 + $0xc0] sm:$0xff]
        %v230 = vld [vmem:[%s167 + $0xc8] sm:$0xff]
        %v231 = vld [vmem:[%s167 + $0xd0] sm:$0xff]
        %v232 = vld [vmem:[%s167 + $0xd8] sm:$0xff]
        %v233 = vld [vmem:[%s167 + $0xe0] sm:$0xff]
        %v234 = vld [vmem:[%s167 + $0xe8] sm:$0xff]
        %v235 = vld [vmem:[%s167 + $0xf0] sm:$0xff]
        %v236 = vld [vmem:[%s167 + $0xf8] sm:$0xff]
        %v237 = vld [vmem:[%s167 + $0x100] sm:$0xff]
        %v238 = vld [vmem:[%s167 + $0x108] sm:$0xff]
        %v239 = vld [vmem:[%s167 + $0x110] sm:$0xff]
        %v240 = vld [vmem:[%s167 + $0x118] sm:$0xff]
        %v241 = vld [vmem:[%s167 + $0x120] sm:$0xff]
        %v242 = vld [vmem:[%s167 + $0x128] sm:$0xff]
        %v243 = vld [vmem:[%s167 + $0x130] sm:$0xff]
        %v244 = vld [vmem:[%s167 + $0x138] sm:$0xff]
        %v245 = vld [vmem:[%s167 + $0x140] sm:$0xff]
        %v246 = vld [vmem:[%s167 + $0x148] sm:$0xff]
        %v247 = vld [vmem:[%s167 + $0x150] sm:$0xff]
        %v248 = vld [vmem:[%s167 + $0x158] sm:$0xff]
        %v249 = vld [vmem:[%s167 + $0x160] sm:$0xff]
        %v250 = vld [vmem:[%s167 + $0x168] sm:$0xff]
        %v251 = vld [vmem:[%s167 + $0x170] sm:$0xff]
        %v252 = vld [vmem:[%s167 + $0x178] sm:$0xff]
        %v253 = vld [vmem:[%s167 + $0x180] sm:$0xff]
        %v254 = vld [vmem:[%s167 + $0x188] sm:$0xff]
        %v255 = vld [vmem:[%s167 + $0x190] sm:$0xff]
        %v256 = vld [vmem:[%s167 + $0x198] sm:$0xff]
        %v257 = vld [vmem:[%s167 + $0x1a0] sm:$0xff]
        %v258 = vld [vmem:[%s167 + $0x1a8] sm:$0xff]
        %v259 = vld [vmem:[%s167 + $0x1b0] sm:$0xff]
        %v260 = vld [vmem:[%s167 + $0x1b8] sm:$0xff]
        %v261 = vld [vmem:[%s167 + $0x1c0] sm:$0xff]
        %v262 = vld [vmem:[%s167 + $0x1c8] sm:$0xff]
        %v263 = vld [vmem:[%s167 + $0x1d0] sm:$0xff]
        %v264 = vld [vmem:[%s167 + $0x1d8] sm:$0xff]
        %v265 = vld [vmem:[%s167 + $0x1e0] sm:$0xff]
        %v266 = vld [vmem:[%s167 + $0x1e8] sm:$0xff]
        %v267 = vld [vmem:[%s167 + $0x1f0] sm:$0xff]
        %v268 = vld [vmem:[%s167 + $0x1f8] sm:$0xff]
        %v269 = vld [vmem:[%s167 + $0x200] sm:$0xff]
        %v270 = vld [vmem:[%s167 + $0x208] sm:$0xff]
        %v271 = vld [vmem:[%s167 + $0x210] sm:$0xff]
        %v272 = vld [vmem:[%s167 + $0x218] sm:$0xff]
        %v273 = vld [vmem:[%s167 + $0x220] sm:$0xff]
        %v274 = vld [vmem:[%s167 + $0x228] sm:$0xff]
        %v275 = vld [vmem:[%s167 + $0x230] sm:$0xff]
        %v276 = vld [vmem:[%s167 + $0x238] sm:$0xff]
        %v277 = vld [vmem:[%s167 + $0x240] sm:$0xff]
        %v278 = vld [vmem:[%s167 + $0x248] sm:$0xff]
        %v279 = vld [vmem:[%s167 + $0x250] sm:$0xff]
        %v280 = vld [vmem:[%s167 + $0x258] sm:$0xff]
        %v281 = vld [vmem:[%s167 + $0x260] sm:$0xff]
        %v282 = vld [vmem:[%s167 + $0x268] sm:$0xff]
        %v283 = vld [vmem:[%s167 + $0x270] sm:$0xff]
        %v284 = vld [vmem:[%s167 + $0x278] sm:$0xff]
        %v285 = vld [vmem:[%s167 + $0x280] sm:$0xff]
        %v286 = vld [vmem:[%s167 + $0x288] sm:$0xff]
        %v287 = vld [vmem:[%s167 + $0x290] sm:$0xff]
        %v288 = vld [vmem:[%s167 + $0x298] sm:$0xff]
        %v289 = vld [vmem:[%s167 + $0x2a0] sm:$0xff]
        %v290 = vld [vmem:[%s167 + $0x2a8] sm:$0xff]
        %v291 = vld [vmem:[%s167 + $0x2b0] sm:$0xff]
        %v292 = vld [vmem:[%s167 + $0x2b8] sm:$0xff]
        %v293 = vld [vmem:[%s167 + $0x2c0] sm:$0xff]
        %v294 = vld [vmem:[%s167 + $0x2c8] sm:$0xff]
        %v295 = vld [vmem:[%s167 + $0x2d0] sm:$0xff]
        %v296 = vld [vmem:[%s167 + $0x2d8] sm:$0xff]
        %v297 = vld [vmem:[%s167 + $0x2e0] sm:$0xff]
        %v298 = vld [vmem:[%s167 + $0x2e8] sm:$0xff]
        %v299 = vld [vmem:[%s167 + $0x2f0] sm:$0xff]
        %v300 = vld [vmem:[%s167 + $0x2f8] sm:$0xff]
        %v301 = vld [vmem:[%s167 + $0x300] sm:$0xff]
        %v302 = vld [vmem:[%s167 + $0x308] sm:$0xff]
        %v303 = vld [vmem:[%s167 + $0x310] sm:$0xff]
        %v304 = vld [vmem:[%s167 + $0x318] sm:$0xff]
        %v305 = vld [vmem:[%s167 + $0x320] sm:$0xff]
        %v306 = vld [vmem:[%s167 + $0x328] sm:$0xff]
        %v307 = vld [vmem:[%s167 + $0x330] sm:$0xff]
        %v308 = vld [vmem:[%s167 + $0x338] sm:$0xff]
        %v309 = vld [vmem:[%s167 + $0x340] sm:$0xff]
        %v310 = vld [vmem:[%s167 + $0x348] sm:$0xff]
        %v311 = vld [vmem:[%s167 + $0x350] sm:$0xff]
        %v312 = vld [vmem:[%s167 + $0x358] sm:$0xff]
        %v313 = vld [vmem:[%s167 + $0x360] sm:$0xff]
        %v314 = vld [vmem:[%s167 + $0x368] sm:$0xff]
        %v315 = vld [vmem:[%s167 + $0x370] sm:$0xff]
        %v316 = vld [vmem:[%s167 + $0x378] sm:$0xff]
        %v317 = vld [vmem:[%s167 + $0x380] sm:$0xff]
        %v318 = vld [vmem:[%s167 + $0x388] sm:$0xff]
        %v319 = vld [vmem:[%s167 + $0x390] sm:$0xff]
        %v320 = vld [vmem:[%s167 + $0x398] sm:$0xff]
        %v321 = vld [vmem:[%s167 + $0x3a0] sm:$0xff]
        %v322 = vld [vmem:[%s167 + $0x3a8] sm:$0xff]
        %v323 = vld [vmem:[%s167 + $0x3b0] sm:$0xff]
        %v324 = vld [vmem:[%s167 + $0x3b8] sm:$0xff]
        %v325 = vld [vmem:[%s167 + $0x3c0] sm:$0xff]
        %v326 = vld [vmem:[%s167 + $0x3c8] sm:$0xff]
        %v327 = vld [vmem:[%s167 + $0x3d0] sm:$0xff]
        %v328 = vld [vmem:[%s167 + $0x3d8] sm:$0xff]
        %v329 = vld [vmem:[%s167 + $0x3e0] sm:$0xff]
        %v330 = vld [vmem:[%s167 + $0x3e8] sm:$0xff]
        %v331 = vld [vmem:[%s167 + $0x3f0] sm:$0xff]
        %v332 = vld [vmem:[%s167 + $0x3f8] sm:$0xff]
        %v333 = vld [vmem:[%s176] sm:$0xff]
        %v334 = vld [vmem:[%s176 + $0x8] sm:$0xff]
        %v335 = vld [vmem:[%s176 + $0x10] sm:$0xff]
        %v336 = vld [vmem:[%s176 + $0x18] sm:$0xff]
        %v337 = vld [vmem:[%s176 + $0x20] sm:$0xff]
        %v338 = vld [vmem:[%s176 + $0x28] sm:$0xff]
        %v339 = vld [vmem:[%s176 + $0x30] sm:$0xff]
        %v340 = vld [vmem:[%s176 + $0x38] sm:$0xff]
        %v341 = vld [vmem:[%s176 + $0x40] sm:$0xff]
        %v342 = vld [vmem:[%s176 + $0x48] sm:$0xff]
        %v343 = vld [vmem:[%s176 + $0x50] sm:$0xff]
        %v344 = vld [vmem:[%s176 + $0x58] sm:$0xff]
        %v345 = vld [vmem:[%s176 + $0x60] sm:$0xff]
        %v346 = vld [vmem:[%s176 + $0x68] sm:$0xff]
        %v347 = vld [vmem:[%s176 + $0x70] sm:$0xff]
        %v348 = vld [vmem:[%s176 + $0x78] sm:$0xff]
        %v349 = vld [vmem:[%s176 + $0x80] sm:$0xff]
        %v350 = vld [vmem:[%s176 + $0x88] sm:$0xff]
        %v351 = vld [vmem:[%s176 + $0x90] sm:$0xff]
        %v352 = vld [vmem:[%s176 + $0x98] sm:$0xff]
        %v353 = vld [vmem:[%s176 + $0xa0] sm:$0xff]
        %v354 = vld [vmem:[%s176 + $0xa8] sm:$0xff]
        %v355 = vld [vmem:[%s176 + $0xb0] sm:$0xff]
        %v356 = vld [vmem:[%s176 + $0xb8] sm:$0xff]
        %v357 = vld [vmem:[%s176 + $0xc0] sm:$0xff]
        %v358 = vld [vmem:[%s176 + $0xc8] sm:$0xff]
        %v359 = vld [vmem:[%s176 + $0xd0] sm:$0xff]
        %v360 = vld [vmem:[%s176 + $0xd8] sm:$0xff]
        %v361 = vld [vmem:[%s176 + $0xe0] sm:$0xff]
        %v362 = vld [vmem:[%s176 + $0xe8] sm:$0xff]
        %v363 = vld [vmem:[%s176 + $0xf0] sm:$0xff]
        %v364 = vld [vmem:[%s176 + $0xf8] sm:$0xff]
        %v365 = vld [vmem:[%s176 + $0x100] sm:$0xff]
        %v366 = vld [vmem:[%s176 + $0x108] sm:$0xff]
        %v367 = vld [vmem:[%s176 + $0x110] sm:$0xff]
        %v368 = vld [vmem:[%s176 + $0x118] sm:$0xff]
        %v369 = vld [vmem:[%s176 + $0x120] sm:$0xff]
        %v370 = vld [vmem:[%s176 + $0x128] sm:$0xff]
        %v371 = vld [vmem:[%s176 + $0x130] sm:$0xff]
        %v372 = vld [vmem:[%s176 + $0x138] sm:$0xff]
        %v373 = vld [vmem:[%s176 + $0x140] sm:$0xff]
        %v374 = vld [vmem:[%s176 + $0x148] sm:$0xff]
        %v375 = vld [vmem:[%s176 + $0x150] sm:$0xff]
        %v376 = vld [vmem:[%s176 + $0x158] sm:$0xff]
        %v377 = vld [vmem:[%s176 + $0x160] sm:$0xff]
        %v378 = vld [vmem:[%s176 + $0x168] sm:$0xff]
        %v379 = vld [vmem:[%s176 + $0x170] sm:$0xff]
        %v380 = vld [vmem:[%s176 + $0x178] sm:$0xff]
        %v381 = vld [vmem:[%s176 + $0x180] sm:$0xff]
        %v382 = vld [vmem:[%s176 + $0x188] sm:$0xff]
        %v383 = vld [vmem:[%s176 + $0x190] sm:$0xff]
        %v384 = vld [vmem:[%s176 + $0x198] sm:$0xff]
        %v385 = vld [vmem:[%s176 + $0x1a0] sm:$0xff]
        %v386 = vld [vmem:[%s176 + $0x1a8] sm:$0xff]
        %v387 = vld [vmem:[%s176 + $0x1b0] sm:$0xff]
        %v388 = vld [vmem:[%s176 + $0x1b8] sm:$0xff]
        %v389 = vld [vmem:[%s176 + $0x1c0] sm:$0xff]
        %v390 = vld [vmem:[%s176 + $0x1c8] sm:$0xff]
        %v391 = vld [vmem:[%s176 + $0x1d0] sm:$0xff]
        %v392 = vld [vmem:[%s176 + $0x1d8] sm:$0xff]
        %v393 = vld [vmem:[%s176 + $0x1e0] sm:$0xff]
        %v394 = vld [vmem:[%s176 + $0x1e8] sm:$0xff]
        %v395 = vld [vmem:[%s176 + $0x1f0] sm:$0xff]
        %v396 = vld [vmem:[%s176 + $0x1f8] sm:$0xff]
        %v397 = vld [vmem:[%s176 + $0x200] sm:$0xff]
        %v398 = vld [vmem:[%s176 + $0x208] sm:$0xff]
        %v399 = vld [vmem:[%s176 + $0x210] sm:$0xff]
        %v400 = vld [vmem:[%s176 + $0x218] sm:$0xff]
        %v401 = vld [vmem:[%s176 + $0x220] sm:$0xff]
        %v402 = vld [vmem:[%s176 + $0x228] sm:$0xff]
        %v403 = vld [vmem:[%s176 + $0x230] sm:$0xff]
        %v404 = vld [vmem:[%s176 + $0x238] sm:$0xff]
        %v405 = vld [vmem:[%s176 + $0x240] sm:$0xff]
        %v406 = vld [vmem:[%s176 + $0x248] sm:$0xff]
        %v407 = vld [vmem:[%s176 + $0x250] sm:$0xff]
        %v408 = vld [vmem:[%s176 + $0x258] sm:$0xff]
        %v409 = vld [vmem:[%s176 + $0x260] sm:$0xff]
        %v410 = vld [vmem:[%s176 + $0x268] sm:$0xff]
        %v411 = vld [vmem:[%s176 + $0x270] sm:$0xff]
        %v412 = vld [vmem:[%s176 + $0x278] sm:$0xff]
        %v413 = vld [vmem:[%s176 + $0x280] sm:$0xff]
        %v414 = vld [vmem:[%s176 + $0x288] sm:$0xff]
        %v415 = vld [vmem:[%s176 + $0x290] sm:$0xff]
        %v416 = vld [vmem:[%s176 + $0x298] sm:$0xff]
        %v417 = vld [vmem:[%s176 + $0x2a0] sm:$0xff]
        %v418 = vld [vmem:[%s176 + $0x2a8] sm:$0xff]
        %v419 = vld [vmem:[%s176 + $0x2b0] sm:$0xff]
        %v420 = vld [vmem:[%s176 + $0x2b8] sm:$0xff]
        %v421 = vld [vmem:[%s176 + $0x2c0] sm:$0xff]
        %v422 = vld [vmem:[%s176 + $0x2c8] sm:$0xff]
        %v423 = vld [vmem:[%s176 + $0x2d0] sm:$0xff]
        %v424 = vld [vmem:[%s176 + $0x2d8] sm:$0xff]
        %v425 = vld [vmem:[%s176 + $0x2e0] sm:$0xff]
        %v426 = vld [vmem:[%s176 + $0x2e8] sm:$0xff]
        %v427 = vld [vmem:[%s176 + $0x2f0] sm:$0xff]
        %v428 = vld [vmem:[%s176 + $0x2f8] sm:$0xff]
        %v429 = vld [vmem:[%s176 + $0x300] sm:$0xff]
        %v430 = vld [vmem:[%s176 + $0x308] sm:$0xff]
        %v431 = vld [vmem:[%s176 + $0x310] sm:$0xff]
        %v432 = vld [vmem:[%s176 + $0x318] sm:$0xff]
        %v433 = vld [vmem:[%s176 + $0x320] sm:$0xff]
        %v434 = vld [vmem:[%s176 + $0x328] sm:$0xff]
        %v435 = vld [vmem:[%s176 + $0x330] sm:$0xff]
        %v436 = vld [vmem:[%s176 + $0x338] sm:$0xff]
        %v437 = vld [vmem:[%s176 + $0x340] sm:$0xff]
        %v438 = vld [vmem:[%s176 + $0x348] sm:$0xff]
        %v439 = vld [vmem:[%s176 + $0x350] sm:$0xff]
        %v440 = vld [vmem:[%s176 + $0x358] sm:$0xff]
        %v441 = vld [vmem:[%s176 + $0x360] sm:$0xff]
        %v442 = vld [vmem:[%s176 + $0x368] sm:$0xff]
        %v443 = vld [vmem:[%s176 + $0x370] sm:$0xff]
        %v444 = vld [vmem:[%s176 + $0x378] sm:$0xff]
        %v445 = vld [vmem:[%s176 + $0x380] sm:$0xff]
        %v446 = vld [vmem:[%s176 + $0x388] sm:$0xff]
        %v447 = vld [vmem:[%s176 + $0x390] sm:$0xff]
        %v448 = vld [vmem:[%s176 + $0x398] sm:$0xff]
        %v449 = vld [vmem:[%s176 + $0x3a0] sm:$0xff]
        %v450 = vld [vmem:[%s176 + $0x3a8] sm:$0xff]
        %v451 = vld [vmem:[%s176 + $0x3b0] sm:$0xff]
        %v452 = vld [vmem:[%s176 + $0x3b8] sm:$0xff]
        %v453 = vld [vmem:[%s176 + $0x3c0] sm:$0xff]
        %v454 = vld [vmem:[%s176 + $0x3c8] sm:$0xff]
        %v455 = vld [vmem:[%s176 + $0x3d0] sm:$0xff]
        %v456 = vld [vmem:[%s176 + $0x3d8] sm:$0xff]
        %v457 = vld [vmem:[%s176 + $0x3e0] sm:$0xff]
        %v458 = vld [vmem:[%s176 + $0x3e8] sm:$0xff]
        %v459 = vld [vmem:[%s176 + $0x3f0] sm:$0xff]
        %v460 = vld [vmem:[%s176 + $0x3f8] sm:$0xff]
        %vm461 = vcmp.eq.f32.partialorder %v333, 0.0
        %vm462 = vcmp.eq.f32.partialorder %v334, 0.0
        %vm463 = vcmp.eq.f32.partialorder %v335, 0.0
        %vm464 = vcmp.eq.f32.partialorder %v336, 0.0
        %vm465 = vcmp.eq.f32.partialorder %v337, 0.0
        %vm466 = vcmp.eq.f32.partialorder %v338, 0.0
        %vm467 = vcmp.eq.f32.partialorder %v339, 0.0
        %vm468 = vcmp.eq.f32.partialorder %v340, 0.0
        %vm469 = vcmp.eq.f32.partialorder %v341, 0.0
        %vm470 = vcmp.eq.f32.partialorder %v342, 0.0
        %vm471 = vcmp.eq.f32.partialorder %v343, 0.0
        %vm472 = vcmp.eq.f32.partialorder %v344, 0.0
        %vm473 = vcmp.eq.f32.partialorder %v345, 0.0
        %vm474 = vcmp.eq.f32.partialorder %v346, 0.0
        %vm475 = vcmp.eq.f32.partialorder %v347, 0.0
        %vm476 = vcmp.eq.f32.partialorder %v348, 0.0
        %vm477 = vcmp.eq.f32.partialorder %v349, 0.0
        %vm478 = vcmp.eq.f32.partialorder %v350, 0.0
        %vm479 = vcmp.eq.f32.partialorder %v351, 0.0
        %vm480 = vcmp.eq.f32.partialorder %v352, 0.0
        %vm481 = vcmp.eq.f32.partialorder %v353, 0.0
        %vm482 = vcmp.eq.f32.partialorder %v354, 0.0
        %vm483 = vcmp.eq.f32.partialorder %v355, 0.0
        %vm484 = vcmp.eq.f32.partialorder %v356, 0.0
        %vm485 = vcmp.eq.f32.partialorder %v357, 0.0
        %vm486 = vcmp.eq.f32.partialorder %v358, 0.0
        %vm487 = vcmp.eq.f32.partialorder %v359, 0.0
        %vm488 = vcmp.eq.f32.partialorder %v360, 0.0
        %vm489 = vcmp.eq.f32.partialorder %v361, 0.0
        %vm490 = vcmp.eq.f32.partialorder %v362, 0.0
        %vm491 = vcmp.eq.f32.partialorder %v363, 0.0
        %vm492 = vcmp.eq.f32.partialorder %v364, 0.0
        %vm493 = vcmp.eq.f32.partialorder %v365, 0.0
        %vm494 = vcmp.eq.f32.partialorder %v366, 0.0
        %vm495 = vcmp.eq.f32.partialorder %v367, 0.0
        %vm496 = vcmp.eq.f32.partialorder %v368, 0.0
        %vm497 = vcmp.eq.f32.partialorder %v369, 0.0
        %vm498 = vcmp.eq.f32.partialorder %v370, 0.0
        %vm499 = vcmp.eq.f32.partialorder %v371, 0.0
        %vm500 = vcmp.eq.f32.partialorder %v372, 0.0
        %vm501 = vcmp.eq.f32.partialorder %v373, 0.0
        %vm502 = vcmp.eq.f32.partialorder %v374, 0.0
        %vm503 = vcmp.eq.f32.partialorder %v375, 0.0
        %vm504 = vcmp.eq.f32.partialorder %v376, 0.0
        %vm505 = vcmp.eq.f32.partialorder %v377, 0.0
        %vm506 = vcmp.eq.f32.partialorder %v378, 0.0
        %vm507 = vcmp.eq.f32.partialorder %v379, 0.0
        %vm508 = vcmp.eq.f32.partialorder %v380, 0.0
        %vm509 = vcmp.eq.f32.partialorder %v381, 0.0
        %vm510 = vcmp.eq.f32.partialorder %v382, 0.0
        %vm511 = vcmp.eq.f32.partialorder %v383, 0.0
        %vm512 = vcmp.eq.f32.partialorder %v384, 0.0
        %vm513 = vcmp.eq.f32.partialorder %v385, 0.0
        %vm514 = vcmp.eq.f32.partialorder %v386, 0.0
        %vm515 = vcmp.eq.f32.partialorder %v387, 0.0
        %vm516 = vcmp.eq.f32.partialorder %v388, 0.0
        %vm517 = vcmp.eq.f32.partialorder %v389, 0.0
        %vm518 = vcmp.eq.f32.partialorder %v390, 0.0
        %vm519 = vcmp.eq.f32.partialorder %v391, 0.0
        %vm520 = vcmp.eq.f32.partialorder %v392, 0.0
        %vm521 = vcmp.eq.f32.partialorder %v393, 0.0
        %vm522 = vcmp.eq.f32.partialorder %v394, 0.0
        %vm523 = vcmp.eq.f32.partialorder %v395, 0.0
        %vm524 = vcmp.eq.f32.partialorder %v396, 0.0
        %vm525 = vcmp.eq.f32.partialorder %v397, 0.0
        %vm526 = vcmp.eq.f32.partialorder %v398, 0.0
        %vm527 = vcmp.eq.f32.partialorder %v399, 0.0
        %vm528 = vcmp.eq.f32.partialorder %v400, 0.0
        %vm529 = vcmp.eq.f32.partialorder %v401, 0.0
        %vm530 = vcmp.eq.f32.partialorder %v402, 0.0
        %vm531 = vcmp.eq.f32.partialorder %v403, 0.0
        %vm532 = vcmp.eq.f32.partialorder %v404, 0.0
        %vm533 = vcmp.eq.f32.partialorder %v405, 0.0
        %vm534 = vcmp.eq.f32.partialorder %v406, 0.0
        %vm535 = vcmp.eq.f32.partialorder %v407, 0.0
        %vm536 = vcmp.eq.f32.partialorder %v408, 0.0
        %vm537 = vcmp.eq.f32.partialorder %v409, 0.0
        %vm538 = vcmp.eq.f32.partialorder %v410, 0.0
        %vm539 = vcmp.eq.f32.partialorder %v411, 0.0
        %vm540 = vcmp.eq.f32.partialorder %v412, 0.0
        %vm541 = vcmp.eq.f32.partialorder %v413, 0.0
        %vm542 = vcmp.eq.f32.partialorder %v414, 0.0
        %vm543 = vcmp.eq.f32.partialorder %v415, 0.0
        %vm544 = vcmp.eq.f32.partialorder %v416, 0.0
        %vm545 = vcmp.eq.f32.partialorder %v417, 0.0
        %vm546 = vcmp.eq.f32.partialorder %v418, 0.0
        %vm547 = vcmp.eq.f32.partialorder %v419, 0.0
        %vm548 = vcmp.eq.f32.partialorder %v420, 0.0
        %vm549 = vcmp.eq.f32.partialorder %v421, 0.0
        %vm550 = vcmp.eq.f32.partialorder %v422, 0.0
        %vm551 = vcmp.eq.f32.partialorder %v423, 0.0
        %vm552 = vcmp.eq.f32.partialorder %v424, 0.0
        %vm553 = vcmp.eq.f32.partialorder %v425, 0.0
        %vm554 = vcmp.eq.f32.partialorder %v426, 0.0
        %vm555 = vcmp.eq.f32.partialorder %v427, 0.0
        %vm556 = vcmp.eq.f32.partialorder %v428, 0.0
        %vm557 = vcmp.eq.f32.partialorder %v429, 0.0
        %vm558 = vcmp.eq.f32.partialorder %v430, 0.0
        %vm559 = vcmp.eq.f32.partialorder %v431, 0.0
        %vm560 = vcmp.eq.f32.partialorder %v432, 0.0
        %vm561 = vcmp.eq.f32.partialorder %v433, 0.0
        %vm562 = vcmp.eq.f32.partialorder %v434, 0.0
        %vm563 = vcmp.eq.f32.partialorder %v435, 0.0
        %vm564 = vcmp.eq.f32.partialorder %v436, 0.0
        %vm565 = vcmp.eq.f32.partialorder %v437, 0.0
        %vm566 = vcmp.eq.f32.partialorder %v438, 0.0
        %vm567 = vcmp.eq.f32.partialorder %v439, 0.0
        %vm568 = vcmp.eq.f32.partialorder %v440, 0.0
        %vm569 = vcmp.eq.f32.partialorder %v441, 0.0
        %vm570 = vcmp.eq.f32.partialorder %v442, 0.0
        %vm571 = vcmp.eq.f32.partialorder %v443, 0.0
        %vm572 = vcmp.eq.f32.partialorder %v444, 0.0
        %vm573 = vcmp.eq.f32.partialorder %v445, 0.0
        %vm574 = vcmp.eq.f32.partialorder %v446, 0.0
        %vm575 = vcmp.eq.f32.partialorder %v447, 0.0
        %vm576 = vcmp.eq.f32.partialorder %v448, 0.0
        %vm577 = vcmp.eq.f32.partialorder %v449, 0.0
        %vm578 = vcmp.eq.f32.partialorder %v450, 0.0
        %vm579 = vcmp.eq.f32.partialorder %v451, 0.0
        %vm580 = vcmp.eq.f32.partialorder %v452, 0.0
        %vm581 = vcmp.eq.f32.partialorder %v453, 0.0
        %vm582 = vcmp.eq.f32.partialorder %v454, 0.0
        %vm583 = vcmp.eq.f32.partialorder %v455, 0.0
        %vm584 = vcmp.eq.f32.partialorder %v456, 0.0
        %vm585 = vcmp.eq.f32.partialorder %v457, 0.0
        %vm586 = vcmp.eq.f32.partialorder %v458, 0.0
        %vm587 = vcmp.eq.f32.partialorder %v459, 0.0
        %vm588 = vcmp.eq.f32.partialorder %v460, 0.0
        %vm589 = vcmp.eq.f32.partialorder %v205, 2.0
        %vm590 = vcmp.eq.f32.partialorder %v206, 2.0
        %vm591 = vcmp.eq.f32.partialorder %v207, 2.0
        %vm592 = vcmp.eq.f32.partialorder %v208, 2.0
        %vm593 = vcmp.eq.f32.partialorder %v209, 2.0
        %vm594 = vcmp.eq.f32.partialorder %v210, 2.0
        %vm595 = vcmp.eq.f32.partialorder %v211, 2.0
        %vm596 = vcmp.eq.f32.partialorder %v212, 2.0
        %vm597 = vcmp.eq.f32.partialorder %v213, 2.0
        %vm598 = vcmp.eq.f32.partialorder %v214, 2.0
        %vm599 = vcmp.eq.f32.partialorder %v215, 2.0
        %vm600 = vcmp.eq.f32.partialorder %v216, 2.0
        %vm601 = vcmp.eq.f32.partialorder %v217, 2.0
        %vm602 = vcmp.eq.f32.partialorder %v218, 2.0
        %vm603 = vcmp.eq.f32.partialorder %v219, 2.0
        %vm604 = vcmp.eq.f32.partialorder %v220, 2.0
        %vm605 = vcmp.eq.f32.partialorder %v221, 2.0
        %vm606 = vcmp.eq.f32.partialorder %v222, 2.0
        %vm607 = vcmp.eq.f32.partialorder %v223, 2.0
        %vm608 = vcmp.eq.f32.partialorder %v224, 2.0
        %vm609 = vcmp.eq.f32.partialorder %v225, 2.0
        %vm610 = vcmp.eq.f32.partialorder %v226, 2.0
        %vm611 = vcmp.eq.f32.partialorder %v227, 2.0
        %vm612 = vcmp.eq.f32.partialorder %v228, 2.0
        %vm613 = vcmp.eq.f32.partialorder %v229, 2.0
        %vm614 = vcmp.eq.f32.partialorder %v230, 2.0
        %vm615 = vcmp.eq.f32.partialorder %v231, 2.0
        %vm616 = vcmp.eq.f32.partialorder %v232, 2.0
        %vm617 = vcmp.eq.f32.partialorder %v233, 2.0
        %vm618 = vcmp.eq.f32.partialorder %v234, 2.0
        %vm619 = vcmp.eq.f32.partialorder %v235, 2.0
        %vm620 = vcmp.eq.f32.partialorder %v236, 2.0
        %vm621 = vcmp.eq.f32.partialorder %v237, 2.0
        %vm622 = vcmp.eq.f32.partialorder %v238, 2.0
        %vm623 = vcmp.eq.f32.partialorder %v239, 2.0
        %vm624 = vcmp.eq.f32.partialorder %v240, 2.0
        %vm625 = vcmp.eq.f32.partialorder %v241, 2.0
        %vm626 = vcmp.eq.f32.partialorder %v242, 2.0
        %vm627 = vcmp.eq.f32.partialorder %v243, 2.0
        %vm628 = vcmp.eq.f32.partialorder %v244, 2.0
        %vm629 = vcmp.eq.f32.partialorder %v245, 2.0
        %vm630 = vcmp.eq.f32.partialorder %v246, 2.0
        %vm631 = vcmp.eq.f32.partialorder %v247, 2.0
        %vm632 = vcmp.eq.f32.partialorder %v248, 2.0
        %vm633 = vcmp.eq.f32.partialorder %v249, 2.0
        %vm634 = vcmp.eq.f32.partialorder %v250, 2.0
        %vm635 = vcmp.eq.f32.partialorder %v251, 2.0
        %vm636 = vcmp.eq.f32.partialorder %v252, 2.0
        %vm637 = vcmp.eq.f32.partialorder %v253, 2.0
        %vm638 = vcmp.eq.f32.partialorder %v254, 2.0
        %vm639 = vcmp.eq.f32.partialorder %v255, 2.0
        %vm640 = vcmp.eq.f32.partialorder %v256, 2.0
        %vm641 = vcmp.eq.f32.partialorder %v257, 2.0
        %vm642 = vcmp.eq.f32.partialorder %v258, 2.0
        %vm643 = vcmp.eq.f32.partialorder %v259, 2.0
        %vm644 = vcmp.eq.f32.partialorder %v260, 2.0
        %vm645 = vcmp.eq.f32.partialorder %v261, 2.0
        %vm646 = vcmp.eq.f32.partialorder %v262, 2.0
        %vm647 = vcmp.eq.f32.partialorder %v263, 2.0
        %vm648 = vcmp.eq.f32.partialorder %v264, 2.0
        %vm649 = vcmp.eq.f32.partialorder %v265, 2.0
        %vm650 = vcmp.eq.f32.partialorder %v266, 2.0
        %vm651 = vcmp.eq.f32.partialorder %v267, 2.0
        %vm652 = vcmp.eq.f32.partialorder %v268, 2.0
        %vm653 = vcmp.eq.f32.partialorder %v269, 2.0
        %vm654 = vcmp.eq.f32.partialorder %v270, 2.0
        %vm655 = vcmp.eq.f32.partialorder %v271, 2.0
        %vm656 = vcmp.eq.f32.partialorder %v272, 2.0
        %vm657 = vcmp.eq.f32.partialorder %v273, 2.0
        %vm658 = vcmp.eq.f32.partialorder %v274, 2.0
        %vm659 = vcmp.eq.f32.partialorder %v275, 2.0
        %vm660 = vcmp.eq.f32.partialorder %v276, 2.0
        %vm661 = vcmp.eq.f32.partialorder %v277, 2.0
        %vm662 = vcmp.eq.f32.partialorder %v278, 2.0
        %vm663 = vcmp.eq.f32.partialorder %v279, 2.0
        %vm664 = vcmp.eq.f32.partialorder %v280, 2.0
        %vm665 = vcmp.eq.f32.partialorder %v281, 2.0
        %vm666 = vcmp.eq.f32.partialorder %v282, 2.0
        %vm667 = vcmp.eq.f32.partialorder %v283, 2.0
        %vm668 = vcmp.eq.f32.partialorder %v284, 2.0
        %vm669 = vcmp.eq.f32.partialorder %v285, 2.0
        %vm670 = vcmp.eq.f32.partialorder %v286, 2.0
        %vm671 = vcmp.eq.f32.partialorder %v287, 2.0
        %vm672 = vcmp.eq.f32.partialorder %v288, 2.0
        %vm673 = vcmp.eq.f32.partialorder %v289, 2.0
        %vm674 = vcmp.eq.f32.partialorder %v290, 2.0
        %vm675 = vcmp.eq.f32.partialorder %v291, 2.0
        %vm676 = vcmp.eq.f32.partialorder %v292, 2.0
        %vm677 = vcmp.eq.f32.partialorder %v293, 2.0
        %vm678 = vcmp.eq.f32.partialorder %v294, 2.0
        %vm679 = vcmp.eq.f32.partialorder %v295, 2.0
        %vm680 = vcmp.eq.f32.partialorder %v296, 2.0
        %vm681 = vcmp.eq.f32.partialorder %v297, 2.0
        %vm682 = vcmp.eq.f32.partialorder %v298, 2.0
        %vm683 = vcmp.eq.f32.partialorder %v299, 2.0
        %vm684 = vcmp.eq.f32.partialorder %v300, 2.0
        %vm685 = vcmp.eq.f32.partialorder %v301, 2.0
        %vm686 = vcmp.eq.f32.partialorder %v302, 2.0
        %vm687 = vcmp.eq.f32.partialorder %v303, 2.0
        %vm688 = vcmp.eq.f32.partialorder %v304, 2.0
        %vm689 = vcmp.eq.f32.partialorder %v305, 2.0
        %vm690 = vcmp.eq.f32.partialorder %v306, 2.0
        %vm691 = vcmp.eq.f32.partialorder %v307, 2.0
        %vm692 = vcmp.eq.f32.partialorder %v308, 2.0
        %vm693 = vcmp.eq.f32.partialorder %v309, 2.0
        %vm694 = vcmp.eq.f32.partialorder %v310, 2.0
        %vm695 = vcmp.eq.f32.partialorder %v311, 2.0
        %vm696 = vcmp.eq.f32.partialorder %v312, 2.0
        %vm697 = vcmp.eq.f32.partialorder %v313, 2.0
        %vm698 = vcmp.eq.f32.partialorder %v314, 2.0
        %vm699 = vcmp.eq.f32.partialorder %v315, 2.0
        %vm700 = vcmp.eq.f32.partialorder %v316, 2.0
        %vm701 = vcmp.eq.f32.partialorder %v317, 2.0
        %vm702 = vcmp.eq.f32.partialorder %v318, 2.0
        %vm703 = vcmp.eq.f32.partialorder %v319, 2.0
        %vm704 = vcmp.eq.f32.partialorder %v320, 2.0
        %vm705 = vcmp.eq.f32.partialorder %v321, 2.0
        %vm706 = vcmp.eq.f32.partialorder %v322, 2.0
        %vm707 = vcmp.eq.f32.partialorder %v323, 2.0
        %vm708 = vcmp.eq.f32.partialorder %v324, 2.0
        %vm709 = vcmp.eq.f32.partialorder %v325, 2.0
        %vm710 = vcmp.eq.f32.partialorder %v326, 2.0
        %vm711 = vcmp.eq.f32.partialorder %v327, 2.0
        %vm712 = vcmp.eq.f32.partialorder %v328, 2.0
        %vm713 = vcmp.eq.f32.partialorder %v329, 2.0
        %vm714 = vcmp.eq.f32.partialorder %v330, 2.0
        %vm715 = vcmp.eq.f32.partialorder %v331, 2.0
        %vm716 = vcmp.eq.f32.partialorder %v332, 2.0
        %vm717 = vcmp.eq.f32.partialorder %v205, 3.0
        %vm718 = vcmp.eq.f32.partialorder %v206, 3.0
        %vm719 = vcmp.eq.f32.partialorder %v207, 3.0
        %vm720 = vcmp.eq.f32.partialorder %v208, 3.0
        %vm721 = vcmp.eq.f32.partialorder %v209, 3.0
        %vm722 = vcmp.eq.f32.partialorder %v210, 3.0
        %vm723 = vcmp.eq.f32.partialorder %v211, 3.0
        %vm724 = vcmp.eq.f32.partialorder %v212, 3.0
        %vm725 = vcmp.eq.f32.partialorder %v213, 3.0
        %vm726 = vcmp.eq.f32.partialorder %v214, 3.0
        %vm727 = vcmp.eq.f32.partialorder %v215, 3.0
        %vm728 = vcmp.eq.f32.partialorder %v216, 3.0
        %vm729 = vcmp.eq.f32.partialorder %v217, 3.0
        %vm730 = vcmp.eq.f32.partialorder %v218, 3.0
        %vm731 = vcmp.eq.f32.partialorder %v219, 3.0
        %vm732 = vcmp.eq.f32.partialorder %v220, 3.0
        %vm733 = vcmp.eq.f32.partialorder %v221, 3.0
        %vm734 = vcmp.eq.f32.partialorder %v222, 3.0
        %vm735 = vcmp.eq.f32.partialorder %v223, 3.0
        %vm736 = vcmp.eq.f32.partialorder %v224, 3.0
        %vm737 = vcmp.eq.f32.partialorder %v225, 3.0
        %vm738 = vcmp.eq.f32.partialorder %v226, 3.0
        %vm739 = vcmp.eq.f32.partialorder %v227, 3.0
        %vm740 = vcmp.eq.f32.partialorder %v228, 3.0
        %vm741 = vcmp.eq.f32.partialorder %v229, 3.0
        %vm742 = vcmp.eq.f32.partialorder %v230, 3.0
        %vm743 = vcmp.eq.f32.partialorder %v231, 3.0
        %vm744 = vcmp.eq.f32.partialorder %v232, 3.0
        %vm745 = vcmp.eq.f32.partialorder %v233, 3.0
        %vm746 = vcmp.eq.f32.partialorder %v234, 3.0
        %vm747 = vcmp.eq.f32.partialorder %v235, 3.0
        %vm748 = vcmp.eq.f32.partialorder %v236, 3.0
        %vm749 = vcmp.eq.f32.partialorder %v237, 3.0
        %vm750 = vcmp.eq.f32.partialorder %v238, 3.0
        %vm751 = vcmp.eq.f32.partialorder %v239, 3.0
        %vm752 = vcmp.eq.f32.partialorder %v240, 3.0
        %vm753 = vcmp.eq.f32.partialorder %v241, 3.0
        %vm754 = vcmp.eq.f32.partialorder %v242, 3.0
        %vm755 = vcmp.eq.f32.partialorder %v243, 3.0
        %vm756 = vcmp.eq.f32.partialorder %v244, 3.0
        %vm757 = vcmp.eq.f32.partialorder %v245, 3.0
        %vm758 = vcmp.eq.f32.partialorder %v246, 3.0
        %vm759 = vcmp.eq.f32.partialorder %v247, 3.0
        %vm760 = vcmp.eq.f32.partialorder %v248, 3.0
        %vm761 = vcmp.eq.f32.partialorder %v249, 3.0
        %vm762 = vcmp.eq.f32.partialorder %v250, 3.0
        %vm763 = vcmp.eq.f32.partialorder %v251, 3.0
        %vm764 = vcmp.eq.f32.partialorder %v252, 3.0
        %vm765 = vcmp.eq.f32.partialorder %v253, 3.0
        %vm766 = vcmp.eq.f32.partialorder %v254, 3.0
        %vm767 = vcmp.eq.f32.partialorder %v255, 3.0
        %vm768 = vcmp.eq.f32.partialorder %v256, 3.0
        %vm769 = vcmp.eq.f32.partialorder %v257, 3.0
        %vm770 = vcmp.eq.f32.partialorder %v258, 3.0
        %vm771 = vcmp.eq.f32.partialorder %v259, 3.0
        %vm772 = vcmp.eq.f32.partialorder %v260, 3.0
        %vm773 = vcmp.eq.f32.partialorder %v261, 3.0
        %vm774 = vcmp.eq.f32.partialorder %v262, 3.0
        %vm775 = vcmp.eq.f32.partialorder %v263, 3.0
        %vm776 = vcmp.eq.f32.partialorder %v264, 3.0
        %vm777 = vcmp.eq.f32.partialorder %v265, 3.0
        %vm778 = vcmp.eq.f32.partialorder %v266, 3.0
        %vm779 = vcmp.eq.f32.partialorder %v267, 3.0
        %vm780 = vcmp.eq.f32.partialorder %v268, 3.0
        %vm781 = vcmp.eq.f32.partialorder %v269, 3.0
        %vm782 = vcmp.eq.f32.partialorder %v270, 3.0
        %vm783 = vcmp.eq.f32.partialorder %v271, 3.0
        %vm784 = vcmp.eq.f32.partialorder %v272, 3.0
        %vm785 = vcmp.eq.f32.partialorder %v273, 3.0
        %vm786 = vcmp.eq.f32.partialorder %v274, 3.0
        %vm787 = vcmp.eq.f32.partialorder %v275, 3.0
        %vm788 = vcmp.eq.f32.partialorder %v276, 3.0
        %vm789 = vcmp.eq.f32.partialorder %v277, 3.0
        %vm790 = vcmp.eq.f32.partialorder %v278, 3.0
        %vm791 = vcmp.eq.f32.partialorder %v279, 3.0
        %vm792 = vcmp.eq.f32.partialorder %v280, 3.0
        %vm793 = vcmp.eq.f32.partialorder %v281, 3.0
        %vm794 = vcmp.eq.f32.partialorder %v282, 3.0
        %vm795 = vcmp.eq.f32.partialorder %v283, 3.0
        %vm796 = vcmp.eq.f32.partialorder %v284, 3.0
        %vm797 = vcmp.eq.f32.partialorder %v285, 3.0
        %vm798 = vcmp.eq.f32.partialorder %v286, 3.0
        %vm799 = vcmp.eq.f32.partialorder %v287, 3.0
        %vm800 = vcmp.eq.f32.partialorder %v288, 3.0
        %vm801 = vcmp.eq.f32.partialorder %v289, 3.0
        %vm802 = vcmp.eq.f32.partialorder %v290, 3.0
        %vm803 = vcmp.eq.f32.partialorder %v291, 3.0
        %vm804 = vcmp.eq.f32.partialorder %v292, 3.0
        %vm805 = vcmp.eq.f32.partialorder %v293, 3.0
        %vm806 = vcmp.eq.f32.partialorder %v294, 3.0
        %vm807 = vcmp.eq.f32.partialorder %v295, 3.0
        %vm808 = vcmp.eq.f32.partialorder %v296, 3.0
        %vm809 = vcmp.eq.f32.partialorder %v297, 3.0
        %vm810 = vcmp.eq.f32.partialorder %v298, 3.0
        %vm811 = vcmp.eq.f32.partialorder %v299, 3.0
        %vm812 = vcmp.eq.f32.partialorder %v300, 3.0
        %vm813 = vcmp.eq.f32.partialorder %v301, 3.0
        %vm814 = vcmp.eq.f32.partialorder %v302, 3.0
        %vm815 = vcmp.eq.f32.partialorder %v303, 3.0
        %vm816 = vcmp.eq.f32.partialorder %v304, 3.0
        %vm817 = vcmp.eq.f32.partialorder %v305, 3.0
        %vm818 = vcmp.eq.f32.partialorder %v306, 3.0
        %vm819 = vcmp.eq.f32.partialorder %v307, 3.0
        %vm820 = vcmp.eq.f32.partialorder %v308, 3.0
        %vm821 = vcmp.eq.f32.partialorder %v309, 3.0
        %vm822 = vcmp.eq.f32.partialorder %v310, 3.0
        %vm823 = vcmp.eq.f32.partialorder %v311, 3.0
        %vm824 = vcmp.eq.f32.partialorder %v312, 3.0
        %vm825 = vcmp.eq.f32.partialorder %v313, 3.0
        %vm826 = vcmp.eq.f32.partialorder %v314, 3.0
        %vm827 = vcmp.eq.f32.partialorder %v315, 3.0
        %vm828 = vcmp.eq.f32.partialorder %v316, 3.0
        %vm829 = vcmp.eq.f32.partialorder %v317, 3.0
        %vm830 = vcmp.eq.f32.partialorder %v318, 3.0
        %vm831 = vcmp.eq.f32.partialorder %v319, 3.0
        %vm832 = vcmp.eq.f32.partialorder %v320, 3.0
        %vm833 = vcmp.eq.f32.partialorder %v321, 3.0
        %vm834 = vcmp.eq.f32.partialorder %v322, 3.0
        %vm835 = vcmp.eq.f32.partialorder %v323, 3.0
        %vm836 = vcmp.eq.f32.partialorder %v324, 3.0
        %vm837 = vcmp.eq.f32.partialorder %v325, 3.0
        %vm838 = vcmp.eq.f32.partialorder %v326, 3.0
        %vm839 = vcmp.eq.f32.partialorder %v327, 3.0
        %vm840 = vcmp.eq.f32.partialorder %v328, 3.0
        %vm841 = vcmp.eq.f32.partialorder %v329, 3.0
        %vm842 = vcmp.eq.f32.partialorder %v330, 3.0
        %vm843 = vcmp.eq.f32.partialorder %v331, 3.0
        %vm844 = vcmp.eq.f32.partialorder %v332, 3.0
        %vm845 = vmor %vm589, %vm717
        %vm846 = vmor %vm590, %vm718
        %vm847 = vmor %vm591, %vm719
        %vm848 = vmor %vm592, %vm720
        %vm849 = vmor %vm593, %vm721
        %vm850 = vmor %vm594, %vm722
        %vm851 = vmor %vm595, %vm723
        %vm852 = vmor %vm596, %vm724
        %vm853 = vmor %vm597, %vm725
        %vm854 = vmor %vm598, %vm726
        %vm855 = vmor %vm599, %vm727
        %vm856 = vmor %vm600, %vm728
        %vm857 = vmor %vm601, %vm729
        %vm858 = vmor %vm602, %vm730
        %vm859 = vmor %vm603, %vm731
        %vm860 = vmor %vm604, %vm732
        %vm861 = vmor %vm605, %vm733
        %vm862 = vmor %vm606, %vm734
        %vm863 = vmor %vm607, %vm735
        %vm864 = vmor %vm608, %vm736
        %vm865 = vmor %vm609, %vm737
        %vm866 = vmor %vm610, %vm738
        %vm867 = vmor %vm611, %vm739
        %vm868 = vmor %vm612, %vm740
        %vm869 = vmor %vm613, %vm741
        %vm870 = vmor %vm614, %vm742
        %vm871 = vmor %vm615, %vm743
        %vm872 = vmor %vm616, %vm744
        %vm873 = vmor %vm617, %vm745
        %vm874 = vmor %vm618, %vm746
        %vm875 = vmor %vm619, %vm747
        %vm876 = vmor %vm620, %vm748
        %vm877 = vmor %vm621, %vm749
        %vm878 = vmor %vm622, %vm750
        %vm879 = vmor %vm623, %vm751
        %vm880 = vmor %vm624, %vm752
        %vm881 = vmor %vm625, %vm753
        %vm882 = vmor %vm626, %vm754
        %vm883 = vmor %vm627, %vm755
        %vm884 = vmor %vm628, %vm756
        %vm885 = vmor %vm629, %vm757
        %vm886 = vmor %vm630, %vm758
        %vm887 = vmor %vm631, %vm759
        %vm888 = vmor %vm632, %vm760
        %vm889 = vmor %vm633, %vm761
        %vm890 = vmor %vm634, %vm762
        %vm891 = vmor %vm635, %vm763
        %vm892 = vmor %vm636, %vm764
        %vm893 = vmor %vm637, %vm765
        %vm894 = vmor %vm638, %vm766
        %vm895 = vmor %vm639, %vm767
        %vm896 = vmor %vm640, %vm768
        %vm897 = vmor %vm641, %vm769
        %vm898 = vmor %vm642, %vm770
        %vm899 = vmor %vm643, %vm771
        %vm900 = vmor %vm644, %vm772
        %vm901 = vmor %vm645, %vm773
        %vm902 = vmor %vm646, %vm774
        %vm903 = vmor %vm647, %vm775
        %vm904 = vmor %vm648, %vm776
        %vm905 = vmor %vm649, %vm777
        %vm906 = vmor %vm650, %vm778
        %vm907 = vmor %vm651, %vm779
        %vm908 = vmor %vm652, %vm780
        %vm909 = vmor %vm653, %vm781
        %vm910 = vmor %vm654, %vm782
        %vm911 = vmor %vm655, %vm783
        %vm912 = vmor %vm656, %vm784
        %vm913 = vmor %vm657, %vm785
        %vm914 = vmor %vm658, %vm786
        %vm915 = vmor %vm659, %vm787
        %vm916 = vmor %vm660, %vm788
        %vm917 = vmor %vm661, %vm789
        %vm918 = vmor %vm662, %vm790
        %vm919 = vmor %vm663, %vm791
        %vm920 = vmor %vm664, %vm792
        %vm921 = vmor %vm665, %vm793
        %vm922 = vmor %vm666, %vm794
        %vm923 = vmor %vm667, %vm795
        %vm924 = vmor %vm668, %vm796
        %vm925 = vmor %vm669, %vm797
        %vm926 = vmor %vm670, %vm798
        %vm927 = vmor %vm671, %vm799
        %vm928 = vmor %vm672, %vm800
        %vm929 = vmor %vm673, %vm801
        %vm930 = vmor %vm674, %vm802
        %vm931 = vmor %vm675, %vm803
        %vm932 = vmor %vm676, %vm804
        %vm933 = vmor %vm677, %vm805
        %vm934 = vmor %vm678, %vm806
        %vm935 = vmor %vm679, %vm807
        %vm936 = vmor %vm680, %vm808
        %vm937 = vmor %vm681, %vm809
        %vm938 = vmor %vm682, %vm810
        %vm939 = vmor %vm683, %vm811
        %vm940 = vmor %vm684, %vm812
        %vm941 = vmor %vm685, %vm813
        %vm942 = vmor %vm686, %vm814
        %vm943 = vmor %vm687, %vm815
        %vm944 = vmor %vm688, %vm816
        %vm945 = vmor %vm689, %vm817
        %vm946 = vmor %vm690, %vm818
        %vm947 = vmor %vm691, %vm819
        %vm948 = vmor %vm692, %vm820
        %vm949 = vmor %vm693, %vm821
        %vm950 = vmor %vm694, %vm822
        %vm951 = vmor %vm695, %vm823
        %vm952 = vmor %vm696, %vm824
        %vm953 = vmor %vm697, %vm825
        %vm954 = vmor %vm698, %vm826
        %vm955 = vmor %vm699, %vm827
        %vm956 = vmor %vm700, %vm828
        %vm957 = vmor %vm701, %vm829
        %vm958 = vmor %vm702, %vm830
        %vm959 = vmor %vm703, %vm831
        %vm960 = vmor %vm704, %vm832
        %vm961 = vmor %vm705, %vm833
        %vm962 = vmor %vm706, %vm834
        %vm963 = vmor %vm707, %vm835
        %vm964 = vmor %vm708, %vm836
        %vm965 = vmor %vm709, %vm837
        %vm966 = vmor %vm710, %vm838
        %vm967 = vmor %vm711, %vm839
        %vm968 = vmor %vm712, %vm840
        %vm969 = vmor %vm713, %vm841
        %vm970 = vmor %vm714, %vm842
        %vm971 = vmor %vm715, %vm843
        %vm972 = vmor %vm716, %vm844
        %vm973 = vmand %vm461, %vm845
        %vm974 = vmand %vm462, %vm846
        %vm975 = vmand %vm463, %vm847
        %vm976 = vmand %vm464, %vm848
        %vm977 = vmand %vm465, %vm849
        %vm978 = vmand %vm466, %vm850
        %vm979 = vmand %vm467, %vm851
        %vm980 = vmand %vm468, %vm852
        %vm981 = vmand %vm469, %vm853
        %vm982 = vmand %vm470, %vm854
        %vm983 = vmand %vm471, %vm855
        %vm984 = vmand %vm472, %vm856
        %vm985 = vmand %vm473, %vm857
        %vm986 = vmand %vm474, %vm858
        %vm987 = vmand %vm475, %vm859
        %vm988 = vmand %vm476, %vm860
        %vm989 = vmand %vm477, %vm861
        %vm990 = vmand %vm478, %vm862
        %vm991 = vmand %vm479, %vm863
        %vm992 = vmand %vm480, %vm864
        %vm993 = vmand %vm481, %vm865
        %vm994 = vmand %vm482, %vm866
        %vm995 = vmand %vm483, %vm867
        %vm996 = vmand %vm484, %vm868
        %vm997 = vmand %vm485, %vm869
        %vm998 = vmand %vm486, %vm870
        %vm999 = vmand %vm487, %vm871
        %vm1000 = vmand %vm488, %vm872
        %vm1001 = vmand %vm489, %vm873
        %vm1002 = vmand %vm490, %vm874
        %vm1003 = vmand %vm491, %vm875
        %vm1004 = vmand %vm492, %vm876
        %vm1005 = vmand %vm493, %vm877
        %vm1006 = vmand %vm494, %vm878
        %vm1007 = vmand %vm495, %vm879
        %vm1008 = vmand %vm496, %vm880
        %vm1009 = vmand %vm497, %vm881
        %vm1010 = vmand %vm498, %vm882
        %vm1011 = vmand %vm499, %vm883
        %vm1012 = vmand %vm500, %vm884
        %vm1013 = vmand %vm501, %vm885
        %vm1014 = vmand %vm502, %vm886
        %vm1015 = vmand %vm503, %vm887
        %vm1016 = vmand %vm504, %vm888
        %vm1017 = vmand %vm505, %vm889
        %vm1018 = vmand %vm506, %vm890
        %vm1019 = vmand %vm507, %vm891
        %vm1020 = vmand %vm508, %vm892
        %vm1021 = vmand %vm509, %vm893
        %vm1022 = vmand %vm510, %vm894
        %vm1023 = vmand %vm511, %vm895
        %vm1024 = vmand %vm512, %vm896
        %vm1025 = vmand %vm513, %vm897
        %vm1026 = vmand %vm514, %vm898
        %vm1027 = vmand %vm515, %vm899
        %vm1028 = vmand %vm516, %vm900
        %vm1029 = vmand %vm517, %vm901
        %vm1030 = vmand %vm518, %vm902
        %vm1031 = vmand %vm519, %vm903
        %vm1032 = vmand %vm520, %vm904
        %vm1033 = vmand %vm521, %vm905
        %vm1034 = vmand %vm522, %vm906
        %vm1035 = vmand %vm523, %vm907
        %vm1036 = vmand %vm524, %vm908
        %vm1037 = vmand %vm525, %vm909
        %vm1038 = vmand %vm526, %vm910
        %vm1039 = vmand %vm527, %vm911
        %vm1040 = vmand %vm528, %vm912
        %vm1041 = vmand %vm529, %vm913
        %vm1042 = vmand %vm530, %vm914
        %vm1043 = vmand %vm531, %vm915
        %vm1044 = vmand %vm532, %vm916
        %vm1045 = vmand %vm533, %vm917
        %vm1046 = vmand %vm534, %vm918
        %vm1047 = vmand %vm535, %vm919
        %vm1048 = vmand %vm536, %vm920
        %vm1049 = vmand %vm537, %vm921
        %vm1050 = vmand %vm538, %vm922
        %vm1051 = vmand %vm539, %vm923
        %vm1052 = vmand %vm540, %vm924
        %vm1053 = vmand %vm541, %vm925
        %vm1054 = vmand %vm542, %vm926
        %vm1055 = vmand %vm543, %vm927
        %vm1056 = vmand %vm544, %vm928
        %vm1057 = vmand %vm545, %vm929
        %vm1058 = vmand %vm546, %vm930
        %vm1059 = vmand %vm547, %vm931
        %vm1060 = vmand %vm548, %vm932
        %vm1061 = vmand %vm549, %vm933
        %vm1062 = vmand %vm550, %vm934
        %vm1063 = vmand %vm551, %vm935
        %vm1064 = vmand %vm552, %vm936
        %vm1065 = vmand %vm553, %vm937
        %vm1066 = vmand %vm554, %vm938
        %vm1067 = vmand %vm555, %vm939
        %vm1068 = vmand %vm556, %vm940
        %vm1069 = vmand %vm557, %vm941
        %vm1070 = vmand %vm558, %vm942
        %vm1071 = vmand %vm559, %vm943
        %vm1072 = vmand %vm560, %vm944
        %vm1073 = vmand %vm561, %vm945
        %vm1074 = vmand %vm562, %vm946
        %vm1075 = vmand %vm563, %vm947
        %vm1076 = vmand %vm564, %vm948
        %vm1077 = vmand %vm565, %vm949
        %vm1078 = vmand %vm566, %vm950
        %vm1079 = vmand %vm567, %vm951
        %vm1080 = vmand %vm568, %vm952
        %vm1081 = vmand %vm569, %vm953
        %vm1082 = vmand %vm570, %vm954
        %vm1083 = vmand %vm571, %vm955
        %vm1084 = vmand %vm572, %vm956
        %vm1085 = vmand %vm573, %vm957
        %vm1086 = vmand %vm574, %vm958
        %vm1087 = vmand %vm575, %vm959
        %vm1088 = vmand %vm576, %vm960
        %vm1089 = vmand %vm577, %vm961
        %vm1090 = vmand %vm578, %vm962
        %vm1091 = vmand %vm579, %vm963
        %vm1092 = vmand %vm580, %vm964
        %vm1093 = vmand %vm581, %vm965
        %vm1094 = vmand %vm582, %vm966
        %vm1095 = vmand %vm583, %vm967
        %vm1096 = vmand %vm584, %vm968
        %vm1097 = vmand %vm585, %vm969
        %vm1098 = vmand %vm586, %vm970
        %vm1099 = vmand %vm587, %vm971
        %vm1100 = vmand %vm588, %vm972
        %v1101 = vsel %vm973, 1, 0
        %v1102 = vsel %vm974, 1, 0
        %v1103 = vsel %vm975, 1, 0
        %v1104 = vsel %vm976, 1, 0
        %v1105 = vsel %vm977, 1, 0
        %v1106 = vsel %vm978, 1, 0
        %v1107 = vsel %vm979, 1, 0
        %v1108 = vsel %vm980, 1, 0
        %v1109 = vsel %vm981, 1, 0
        %v1110 = vsel %vm982, 1, 0
        %v1111 = vsel %vm983, 1, 0
        %v1112 = vsel %vm984, 1, 0
        %v1113 = vsel %vm985, 1, 0
        %v1114 = vsel %vm986, 1, 0
        %v1115 = vsel %vm987, 1, 0
        %v1116 = vsel %vm988, 1, 0
        %v1117 = vsel %vm989, 1, 0
        %v1118 = vsel %vm990, 1, 0
        %v1119 = vsel %vm991, 1, 0
        %v1120 = vsel %vm992, 1, 0
        %v1121 = vsel %vm993, 1, 0
        %v1122 = vsel %vm994, 1, 0
        %v1123 = vsel %vm995, 1, 0
        %v1124 = vsel %vm996, 1, 0
        %v1125 = vsel %vm997, 1, 0
        %v1126 = vsel %vm998, 1, 0
        %v1127 = vsel %vm999, 1, 0
        %v1128 = vsel %vm1000, 1, 0
        %v1129 = vsel %vm1001, 1, 0
        %v1130 = vsel %vm1002, 1, 0
        %v1131 = vsel %vm1003, 1, 0
        %v1132 = vsel %vm1004, 1, 0
        %v1133 = vsel %vm1005, 1, 0
        %v1134 = vsel %vm1006, 1, 0
        %v1135 = vsel %vm1007, 1, 0
        %v1136 = vsel %vm1008, 1, 0
        %v1137 = vsel %vm1009, 1, 0
        %v1138 = vsel %vm1010, 1, 0
        %v1139 = vsel %vm1011, 1, 0
        %v1140 = vsel %vm1012, 1, 0
        %v1141 = vsel %vm1013, 1, 0
        %v1142 = vsel %vm1014, 1, 0
        %v1143 = vsel %vm1015, 1, 0
        %v1144 = vsel %vm1016, 1, 0
        %v1145 = vsel %vm1017, 1, 0
        %v1146 = vsel %vm1018, 1, 0
        %v1147 = vsel %vm1019, 1, 0
        %v1148 = vsel %vm1020, 1, 0
        %v1149 = vsel %vm1021, 1, 0
        %v1150 = vsel %vm1022, 1, 0
        %v1151 = vsel %vm1023, 1, 0
        %v1152 = vsel %vm1024, 1, 0
        %v1153 = vsel %vm1025, 1, 0
        %v1154 = vsel %vm1026, 1, 0
        %v1155 = vsel %vm1027, 1, 0
        %v1156 = vsel %vm1028, 1, 0
        %v1157 = vsel %vm1029, 1, 0
        %v1158 = vsel %vm1030, 1, 0
        %v1159 = vsel %vm1031, 1, 0
        %v1160 = vsel %vm1032, 1, 0
        %v1161 = vsel %vm1033, 1, 0
        %v1162 = vsel %vm1034, 1, 0
        %v1163 = vsel %vm1035, 1, 0
        %v1164 = vsel %vm1036, 1, 0
        %v1165 = vsel %vm1037, 1, 0
        %v1166 = vsel %vm1038, 1, 0
        %v1167 = vsel %vm1039, 1, 0
        %v1168 = vsel %vm1040, 1, 0
        %v1169 = vsel %vm1041, 1, 0
        %v1170 = vsel %vm1042, 1, 0
        %v1171 = vsel %vm1043, 1, 0
        %v1172 = vsel %vm1044, 1, 0
        %v1173 = vsel %vm1045, 1, 0
        %v1174 = vsel %vm1046, 1, 0
        %v1175 = vsel %vm1047, 1, 0
        %v1176 = vsel %vm1048, 1, 0
        %v1177 = vsel %vm1049, 1, 0
        %v1178 = vsel %vm1050, 1, 0
        %v1179 = vsel %vm1051, 1, 0
        %v1180 = vsel %vm1052, 1, 0
        %v1181 = vsel %vm1053, 1, 0
        %v1182 = vsel %vm1054, 1, 0
        %v1183 = vsel %vm1055, 1, 0
        %v1184 = vsel %vm1056, 1, 0
        %v1185 = vsel %vm1057, 1, 0
        %v1186 = vsel %vm1058, 1, 0
        %v1187 = vsel %vm1059, 1, 0
        %v1188 = vsel %vm1060, 1, 0
        %v1189 = vsel %vm1061, 1, 0
        %v1190 = vsel %vm1062, 1, 0
        %v1191 = vsel %vm1063, 1, 0
        %v1192 = vsel %vm1064, 1, 0
        %v1193 = vsel %vm1065, 1, 0
        %v1194 = vsel %vm1066, 1, 0
        %v1195 = vsel %vm1067, 1, 0
        %v1196 = vsel %vm1068, 1, 0
        %v1197 = vsel %vm1069, 1, 0
        %v1198 = vsel %vm1070, 1, 0
        %v1199 = vsel %vm1071, 1, 0
        %v1200 = vsel %vm1072, 1, 0
        %v1201 = vsel %vm1073, 1, 0
        %v1202 = vsel %vm1074, 1, 0
        %v1203 = vsel %vm1075, 1, 0
        %v1204 = vsel %vm1076, 1, 0
        %v1205 = vsel %vm1077, 1, 0
        %v1206 = vsel %vm1078, 1, 0
        %v1207 = vsel %vm1079, 1, 0
        %v1208 = vsel %vm1080, 1, 0
        %v1209 = vsel %vm1081, 1, 0
        %v1210 = vsel %vm1082, 1, 0
        %v1211 = vsel %vm1083, 1, 0
        %v1212 = vsel %vm1084, 1, 0
        %v1213 = vsel %vm1085, 1, 0
        %v1214 = vsel %vm1086, 1, 0
        %v1215 = vsel %vm1087, 1, 0
        %v1216 = vsel %vm1088, 1, 0
        %v1217 = vsel %vm1089, 1, 0
        %v1218 = vsel %vm1090, 1, 0
        %v1219 = vsel %vm1091, 1, 0
        %v1220 = vsel %vm1092, 1, 0
        %v1221 = vsel %vm1093, 1, 0
        %v1222 = vsel %vm1094, 1, 0
        %v1223 = vsel %vm1095, 1, 0
        %v1224 = vsel %vm1096, 1, 0
        %v1225 = vsel %vm1097, 1, 0
        %v1226 = vsel %vm1098, 1, 0
        %v1227 = vsel %vm1099, 1, 0
        %v1228 = vsel %vm1100, 1, 0
        %v1229 = vcvt.s32.f32 %v1101
        %v1230 = vcvt.s32.f32 %v1102
        %v1231 = vcvt.s32.f32 %v1103
        %v1232 = vcvt.s32.f32 %v1104
        %v1233 = vcvt.s32.f32 %v1105
        %v1234 = vcvt.s32.f32 %v1106
        %v1235 = vcvt.s32.f32 %v1107
        %v1236 = vcvt.s32.f32 %v1108
        %v1237 = vcvt.s32.f32 %v1109
        %v1238 = vcvt.s32.f32 %v1110
        %v1239 = vcvt.s32.f32 %v1111
        %v1240 = vcvt.s32.f32 %v1112
        %v1241 = vcvt.s32.f32 %v1113
        %v1242 = vcvt.s32.f32 %v1114
        %v1243 = vcvt.s32.f32 %v1115
        %v1244 = vcvt.s32.f32 %v1116
        %v1245 = vcvt.s32.f32 %v1117
        %v1246 = vcvt.s32.f32 %v1118
        %v1247 = vcvt.s32.f32 %v1119
        %v1248 = vcvt.s32.f32 %v1120
        %v1249 = vcvt.s32.f32 %v1121
        %v1250 = vcvt.s32.f32 %v1122
        %v1251 = vcvt.s32.f32 %v1123
        %v1252 = vcvt.s32.f32 %v1124
        %v1253 = vcvt.s32.f32 %v1125
        %v1254 = vcvt.s32.f32 %v1126
        %v1255 = vcvt.s32.f32 %v1127
        %v1256 = vcvt.s32.f32 %v1128
        %v1257 = vcvt.s32.f32 %v1129
        %v1258 = vcvt.s32.f32 %v1130
        %v1259 = vcvt.s32.f32 %v1131
        %v1260 = vcvt.s32.f32 %v1132
        %v1261 = vcvt.s32.f32 %v1133
        %v1262 = vcvt.s32.f32 %v1134
        %v1263 = vcvt.s32.f32 %v1135
        %v1264 = vcvt.s32.f32 %v1136
        %v1265 = vcvt.s32.f32 %v1137
        %v1266 = vcvt.s32.f32 %v1138
        %v1267 = vcvt.s32.f32 %v1139
        %v1268 = vcvt.s32.f32 %v1140
        %v1269 = vcvt.s32.f32 %v1141
        %v1270 = vcvt.s32.f32 %v1142
        %v1271 = vcvt.s32.f32 %v1143
        %v1272 = vcvt.s32.f32 %v1144
        %v1273 = vcvt.s32.f32 %v1145
        %v1274 = vcvt.s32.f32 %v1146
        %v1275 = vcvt.s32.f32 %v1147
        %v1276 = vcvt.s32.f32 %v1148
        %v1277 = vcvt.s32.f32 %v1149
        %v1278 = vcvt.s32.f32 %v1150
        %v1279 = vcvt.s32.f32 %v1151
        %v1280 = vcvt.s32.f32 %v1152
        %v1281 = vcvt.s32.f32 %v1153
        %v1282 = vcvt.s32.f32 %v1154
        %v1283 = vcvt.s32.f32 %v1155
        %v1284 = vcvt.s32.f32 %v1156
        %v1285 = vcvt.s32.f32 %v1157
        %v1286 = vcvt.s32.f32 %v1158
        %v1287 = vcvt.s32.f32 %v1159
        %v1288 = vcvt.s32.f32 %v1160
        %v1289 = vcvt.s32.f32 %v1161
        %v1290 = vcvt.s32.f32 %v1162
        %v1291 = vcvt.s32.f32 %v1163
        %v1292 = vcvt.s32.f32 %v1164
        %v1293 = vcvt.s32.f32 %v1165
        %v1294 = vcvt.s32.f32 %v1166
        %v1295 = vcvt.s32.f32 %v1167
        %v1296 = vcvt.s32.f32 %v1168
        %v1297 = vcvt.s32.f32 %v1169
        %v1298 = vcvt.s32.f32 %v1170
        %v1299 = vcvt.s32.f32 %v1171
        %v1300 = vcvt.s32.f32 %v1172
        %v1301 = vcvt.s32.f32 %v1173
        %v1302 = vcvt.s32.f32 %v1174
        %v1303 = vcvt.s32.f32 %v1175
        %v1304 = vcvt.s32.f32 %v1176
        %v1305 = vcvt.s32.f32 %v1177
        %v1306 = vcvt.s32.f32 %v1178
        %v1307 = vcvt.s32.f32 %v1179
        %v1308 = vcvt.s32.f32 %v1180
        %v1309 = vcvt.s32.f32 %v1181
        %v1310 = vcvt.s32.f32 %v1182
        %v1311 = vcvt.s32.f32 %v1183
        %v1312 = vcvt.s32.f32 %v1184
        %v1313 = vcvt.s32.f32 %v1185
        %v1314 = vcvt.s32.f32 %v1186
        %v1315 = vcvt.s32.f32 %v1187
        %v1316 = vcvt.s32.f32 %v1188
        %v1317 = vcvt.s32.f32 %v1189
        %v1318 = vcvt.s32.f32 %v1190
        %v1319 = vcvt.s32.f32 %v1191
        %v1320 = vcvt.s32.f32 %v1192
        %v1321 = vcvt.s32.f32 %v1193
        %v1322 = vcvt.s32.f32 %v1194
        %v1323 = vcvt.s32.f32 %v1195
        %v1324 = vcvt.s32.f32 %v1196
        %v1325 = vcvt.s32.f32 %v1197
        %v1326 = vcvt.s32.f32 %v1198
        %v1327 = vcvt.s32.f32 %v1199
        %v1328 = vcvt.s32.f32 %v1200
        %v1329 = vcvt.s32.f32 %v1201
        %v1330 = vcvt.s32.f32 %v1202
        %v1331 = vcvt.s32.f32 %v1203
        %v1332 = vcvt.s32.f32 %v1204
        %v1333 = vcvt.s32.f32 %v1205
        %v1334 = vcvt.s32.f32 %v1206
        %v1335 = vcvt.s32.f32 %v1207
        %v1336 = vcvt.s32.f32 %v1208
        %v1337 = vcvt.s32.f32 %v1209
        %v1338 = vcvt.s32.f32 %v1210
        %v1339 = vcvt.s32.f32 %v1211
        %v1340 = vcvt.s32.f32 %v1212
        %v1341 = vcvt.s32.f32 %v1213
        %v1342 = vcvt.s32.f32 %v1214
        %v1343 = vcvt.s32.f32 %v1215
        %v1344 = vcvt.s32.f32 %v1216
        %v1345 = vcvt.s32.f32 %v1217
        %v1346 = vcvt.s32.f32 %v1218
        %v1347 = vcvt.s32.f32 %v1219
        %v1348 = vcvt.s32.f32 %v1220
        %v1349 = vcvt.s32.f32 %v1221
        %v1350 = vcvt.s32.f32 %v1222
        %v1351 = vcvt.s32.f32 %v1223
        %v1352 = vcvt.s32.f32 %v1224
        %v1353 = vcvt.s32.f32 %v1225
        %v1354 = vcvt.s32.f32 %v1226
        %v1355 = vcvt.s32.f32 %v1227
        %v1356 = vcvt.s32.f32 %v1228
        %1357 = vst [vmem:[%s201] sm:$0xff] %v1229
        %1358 = vst [vmem:[%s201 + $0x8] sm:$0xff] %v1230
        %1359 = vst [vmem:[%s201 + $0x10] sm:$0xff] %v1231
        %1360 = vst [vmem:[%s201 + $0x18] sm:$0xff] %v1232
        %1361 = vst [vmem:[%s201 + $0x20] sm:$0xff] %v1233
        %1362 = vst [vmem:[%s201 + $0x28] sm:$0xff] %v1234
        %1363 = vst [vmem:[%s201 + $0x30] sm:$0xff] %v1235
        %1364 = vst [vmem:[%s201 + $0x38] sm:$0xff] %v1236
        %1365 = vst [vmem:[%s201 + $0x40] sm:$0xff] %v1237
        %1366 = vst [vmem:[%s201 + $0x48] sm:$0xff] %v1238
        %1367 = vst [vmem:[%s201 + $0x50] sm:$0xff] %v1239
        %1368 = vst [vmem:[%s201 + $0x58] sm:$0xff] %v1240
        %1369 = vst [vmem:[%s201 + $0x60] sm:$0xff] %v1241
        %1370 = vst [vmem:[%s201 + $0x68] sm:$0xff] %v1242
        %1371 = vst [vmem:[%s201 + $0x70] sm:$0xff] %v1243
        %1372 = vst [vmem:[%s201 + $0x78] sm:$0xff] %v1244
        %1373 = vst [vmem:[%s201 + $0x80] sm:$0xff] %v1245
        %1374 = vst [vmem:[%s201 + $0x88] sm:$0xff] %v1246
        %1375 = vst [vmem:[%s201 + $0x90] sm:$0xff] %v1247
        %1376 = vst [vmem:[%s201 + $0x98] sm:$0xff] %v1248
        %1377 = vst [vmem:[%s201 + $0xa0] sm:$0xff] %v1249
        %1378 = vst [vmem:[%s201 + $0xa8] sm:$0xff] %v1250
        %1379 = vst [vmem:[%s201 + $0xb0] sm:$0xff] %v1251
        %1380 = vst [vmem:[%s201 + $0xb8] sm:$0xff] %v1252
        %1381 = vst [vmem:[%s201 + $0xc0] sm:$0xff] %v1253
        %1382 = vst [vmem:[%s201 + $0xc8] sm:$0xff] %v1254
        %1383 = vst [vmem:[%s201 + $0xd0] sm:$0xff] %v1255
        %1384 = vst [vmem:[%s201 + $0xd8] sm:$0xff] %v1256
        %1385 = vst [vmem:[%s201 + $0xe0] sm:$0xff] %v1257
        %1386 = vst [vmem:[%s201 + $0xe8] sm:$0xff] %v1258
        %1387 = vst [vmem:[%s201 + $0xf0] sm:$0xff] %v1259
        %1388 = vst [vmem:[%s201 + $0xf8] sm:$0xff] %v1260
        %1389 = vst [vmem:[%s201 + $0x100] sm:$0xff] %v1261
        %1390 = vst [vmem:[%s201 + $0x108] sm:$0xff] %v1262
        %1391 = vst [vmem:[%s201 + $0x110] sm:$0xff] %v1263
        %1392 = vst [vmem:[%s201 + $0x118] sm:$0xff] %v1264
        %1393 = vst [vmem:[%s201 + $0x120] sm:$0xff] %v1265
        %1394 = vst [vmem:[%s201 + $0x128] sm:$0xff] %v1266
        %1395 = vst [vmem:[%s201 + $0x130] sm:$0xff] %v1267
        %1396 = vst [vmem:[%s201 + $0x138] sm:$0xff] %v1268
        %1397 = vst [vmem:[%s201 + $0x140] sm:$0xff] %v1269
        %1398 = vst [vmem:[%s201 + $0x148] sm:$0xff] %v1270
        %1399 = vst [vmem:[%s201 + $0x150] sm:$0xff] %v1271
        %1400 = vst [vmem:[%s201 + $0x158] sm:$0xff] %v1272
        %1401 = vst [vmem:[%s201 + $0x160] sm:$0xff] %v1273
        %1402 = vst [vmem:[%s201 + $0x168] sm:$0xff] %v1274
        %1403 = vst [vmem:[%s201 + $0x170] sm:$0xff] %v1275
        %1404 = vst [vmem:[%s201 + $0x178] sm:$0xff] %v1276
        %1405 = vst [vmem:[%s201 + $0x180] sm:$0xff] %v1277
        %1406 = vst [vmem:[%s201 + $0x188] sm:$0xff] %v1278
        %1407 = vst [vmem:[%s201 + $0x190] sm:$0xff] %v1279
        %1408 = vst [vmem:[%s201 + $0x198] sm:$0xff] %v1280
        %1409 = vst [vmem:[%s201 + $0x1a0] sm:$0xff] %v1281
        %1410 = vst [vmem:[%s201 + $0x1a8] sm:$0xff] %v1282
        %1411 = vst [vmem:[%s201 + $0x1b0] sm:$0xff] %v1283
        %1412 = vst [vmem:[%s201 + $0x1b8] sm:$0xff] %v1284
        %1413 = vst [vmem:[%s201 + $0x1c0] sm:$0xff] %v1285
        %1414 = vst [vmem:[%s201 + $0x1c8] sm:$0xff] %v1286
        %1415 = vst [vmem:[%s201 + $0x1d0] sm:$0xff] %v1287
        %1416 = vst [vmem:[%s201 + $0x1d8] sm:$0xff] %v1288
        %1417 = vst [vmem:[%s201 + $0x1e0] sm:$0xff] %v1289
        %1418 = vst [vmem:[%s201 + $0x1e8] sm:$0xff] %v1290
        %1419 = vst [vmem:[%s201 + $0x1f0] sm:$0xff] %v1291
        %1420 = vst [vmem:[%s201 + $0x1f8] sm:$0xff] %v1292
        %1421 = vst [vmem:[%s201 + $0x200] sm:$0xff] %v1293
        %1422 = vst [vmem:[%s201 + $0x208] sm:$0xff] %v1294
        %1423 = vst [vmem:[%s201 + $0x210] sm:$0xff] %v1295
        %1424 = vst [vmem:[%s201 + $0x218] sm:$0xff] %v1296
        %1425 = vst [vmem:[%s201 + $0x220] sm:$0xff] %v1297
        %1426 = vst [vmem:[%s201 + $0x228] sm:$0xff] %v1298
        %1427 = vst [vmem:[%s201 + $0x230] sm:$0xff] %v1299
        %1428 = vst [vmem:[%s201 + $0x238] sm:$0xff] %v1300
        %1429 = vst [vmem:[%s201 + $0x240] sm:$0xff] %v1301
        %1430 = vst [vmem:[%s201 + $0x248] sm:$0xff] %v1302
        %1431 = vst [vmem:[%s201 + $0x250] sm:$0xff] %v1303
        %1432 = vst [vmem:[%s201 + $0x258] sm:$0xff] %v1304
        %1433 = vst [vmem:[%s201 + $0x260] sm:$0xff] %v1305
        %1434 = vst [vmem:[%s201 + $0x268] sm:$0xff] %v1306
        %1435 = vst [vmem:[%s201 + $0x270] sm:$0xff] %v1307
        %1436 = vst [vmem:[%s201 + $0x278] sm:$0xff] %v1308
        %1437 = vst [vmem:[%s201 + $0x280] sm:$0xff] %v1309
        %1438 = vst [vmem:[%s201 + $0x288] sm:$0xff] %v1310
        %1439 = vst [vmem:[%s201 + $0x290] sm:$0xff] %v1311
        %1440 = vst [vmem:[%s201 + $0x298] sm:$0xff] %v1312
        %1441 = vst [vmem:[%s201 + $0x2a0] sm:$0xff] %v1313
        %1442 = vst [vmem:[%s201 + $0x2a8] sm:$0xff] %v1314
        %1443 = vst [vmem:[%s201 + $0x2b0] sm:$0xff] %v1315
        %1444 = vst [vmem:[%s201 + $0x2b8] sm:$0xff] %v1316
        %1445 = vst [vmem:[%s201 + $0x2c0] sm:$0xff] %v1317
        %1446 = vst [vmem:[%s201 + $0x2c8] sm:$0xff] %v1318
        %1447 = vst [vmem:[%s201 + $0x2d0] sm:$0xff] %v1319
        %1448 = vst [vmem:[%s201 + $0x2d8] sm:$0xff] %v1320
        %1449 = vst [vmem:[%s201 + $0x2e0] sm:$0xff] %v1321
        %1450 = vst [vmem:[%s201 + $0x2e8] sm:$0xff] %v1322
        %1451 = vst [vmem:[%s201 + $0x2f0] sm:$0xff] %v1323
        %1452 = vst [vmem:[%s201 + $0x2f8] sm:$0xff] %v1324
        %1453 = vst [vmem:[%s201 + $0x300] sm:$0xff] %v1325
        %1454 = vst [vmem:[%s201 + $0x308] sm:$0xff] %v1326
        %1455 = vst [vmem:[%s201 + $0x310] sm:$0xff] %v1327
        %1456 = vst [vmem:[%s201 + $0x318] sm:$0xff] %v1328
        %1457 = vst [vmem:[%s201 + $0x320] sm:$0xff] %v1329
        %1458 = vst [vmem:[%s201 + $0x328] sm:$0xff] %v1330
        %1459 = vst [vmem:[%s201 + $0x330] sm:$0xff] %v1331
        %1460 = vst [vmem:[%s201 + $0x338] sm:$0xff] %v1332
        %1461 = vst [vmem:[%s201 + $0x340] sm:$0xff] %v1333
        %1462 = vst [vmem:[%s201 + $0x348] sm:$0xff] %v1334
        %1463 = vst [vmem:[%s201 + $0x350] sm:$0xff] %v1335
        %1464 = vst [vmem:[%s201 + $0x358] sm:$0xff] %v1336
        %1465 = vst [vmem:[%s201 + $0x360] sm:$0xff] %v1337
        %1466 = vst [vmem:[%s201 + $0x368] sm:$0xff] %v1338
        %1467 = vst [vmem:[%s201 + $0x370] sm:$0xff] %v1339
        %1468 = vst [vmem:[%s201 + $0x378] sm:$0xff] %v1340
        %1469 = vst [vmem:[%s201 + $0x380] sm:$0xff] %v1341
        %1470 = vst [vmem:[%s201 + $0x388] sm:$0xff] %v1342
        %1471 = vst [vmem:[%s201 + $0x390] sm:$0xff] %v1343
        %1472 = vst [vmem:[%s201 + $0x398] sm:$0xff] %v1344
        %1473 = vst [vmem:[%s201 + $0x3a0] sm:$0xff] %v1345
        %1474 = vst [vmem:[%s201 + $0x3a8] sm:$0xff] %v1346
        %1475 = vst [vmem:[%s201 + $0x3b0] sm:$0xff] %v1347
        %1476 = vst [vmem:[%s201 + $0x3b8] sm:$0xff] %v1348
        %1477 = vst [vmem:[%s201 + $0x3c0] sm:$0xff] %v1349
        %1478 = vst [vmem:[%s201 + $0x3c8] sm:$0xff] %v1350
        %1479 = vst [vmem:[%s201 + $0x3d0] sm:$0xff] %v1351
        %1480 = vst [vmem:[%s201 + $0x3d8] sm:$0xff] %v1352
        %1481 = vst [vmem:[%s201 + $0x3e0] sm:$0xff] %v1353
        %1482 = vst [vmem:[%s201 + $0x3e8] sm:$0xff] %v1354
        %1483 = vst [vmem:[%s201 + $0x3f0] sm:$0xff] %v1355
        %1484 = vst [vmem:[%s201 + $0x3f8] sm:$0xff] %v1356
        %s1485 = sand.u32 %s82, 1
        %s1486 = scalar_lea.sflag [#allocation4], %s1485
        %s1487 = sand.u32 %s82, 1
        %s1488 = smul.addr %s1487, 1024
        %s1489 = scalar_lea.vmem [#allocation7], %s1488
        // Predicated region
        $region37: #{tpu_custom_call.1} parent=27 // pred_check
          %p1490 = pneg %p92
        $region38: #{tpu_custom_call.1} parent=27 // pred_check_branch
          %1492 = sbr.rel (%p1490) target = $region40
        $region39: #{tpu_custom_call.1} parent=27 // pred_region
          %s1493 = smul.u32 128, %s22
          %s1495 = ssub.s32 16384, 16384
          %1496 = vsyncadd %s1486, %s1495
          %s1497 = smul.addr %s1493, 128
          %s1498 = scalar_lea.hbm %s2, %s1497
          %s1499 = sshll.u32 %s1489, 4
          %s1500 = int_to_ptr.vmem [resolvable:$true] %s1499
          %1505 = dma.vmem_to_hbm [thread:$0]  %s1500, 16384, %s1498, %s1486, 128, 128, 8
        $region40: #{tpu_custom_call.1} parent=27 // pred_fallthru
          _
      $region28: #{tpu_custom_call.1} parent=5 // pred_fallthru
        _
      %p1506 = scmp.le.s32.totalorder 2, %s17
      // Predicated region
      $region41: #{tpu_custom_call.1} parent=5 // pred_check
        %p1507 = pneg %p1506
      $region42: #{tpu_custom_call.1} parent=5 // pred_check_branch
        %1509 = sbr.rel (%p1507) target = $region44
      $region43: #{tpu_custom_call.1} parent=5 // pred_region
        %s1510 = ssub.s32 %s17, 2
        // Predicated region
        $region45: #{tpu_custom_call.1} parent=43 // pred_check
          %p1511 = pneg %p98
        $region46: #{tpu_custom_call.1} parent=43 // pred_check_branch
          %1513 = sbr.rel (%p1511) target = $region48
        $region47: #{tpu_custom_call.1} parent=43 // pred_region
          %s1514 = sand.u32 %s83, 1
          %s1515 = scalar_lea.sflag [#allocation4], %s1514
          %s1516 = sand.u32 %s83, 1
          %s1517 = smul.addr %s1516, 1024
          %s1518 = scalar_lea.vmem [#allocation7], %s1517
          %1519 = dma.done %s1515, 16384
        $region48: #{tpu_custom_call.1} parent=43 // pred_fallthru
          _
      $region44: #{tpu_custom_call.1} parent=5 // pred_fallthru
        _
    $region6: #{tpu_custom_call.1} parent=1 // loop_footer
      %s21 = sadd.s32 1, %s17
    $region7: #{tpu_custom_call.1} parent=1 // loop_footer_branch
      %16 = sbr.rel target = $region3
    $region8: #{tpu_custom_call.1} parent=1 // loop_exit
      _
    %1520 = vsyncpa [#allocation3], 1
    %s1521 = scalar_lea.sflag [#allocation3], 1
    %1522 = vsyncpa %s1521, 1
    %1523 = vsyncpa [#allocation6], 1
    %s1524 = scalar_lea.sflag [#allocation6], 1
    %1525 = vsyncpa %s1524, 1
    %1526 = vsyncpa [#allocation4], 1
    %s1527 = scalar_lea.sflag [#allocation4], 1
    %1528 = vsyncpa %s1527, 1

</llo_original>
